<compile_context>
chip_gen: v6e
topology: v6e:2x2x1
jax: 0.10.0
libtpu: 0.0.40
codegen_flags: <defaults>
</compile_context>

<pallas_src>
import functools

import jax
import jax.numpy as jnp
from jax.experimental import pallas as pl
from jax.experimental.pallas import tpu as pltpu


def _round_up(x, m):
    return ((x + m - 1) // m) * m


def _pick_div_tile(total, cap):
    """Largest multiple of 128 dividing `total`, capped at `cap`; `total` if not 128-aligned."""
    if total % 128 != 0:
        return total
    best = 128
    t = 256
    while t <= min(cap, total):
        if total % t == 0:
            best = t
        t += 128
    return best


def _pick_m_tile(m):
    mp = _round_up(m, 8)
    if mp <= 256:
        return mp, mp
    mp = _round_up(m, 256)
    return 256, mp


# ---------------------------------------------------------------------------
# Pallas kernels
# ---------------------------------------------------------------------------

def _mm_bn_act_kernel(*refs, relu, has_res):
    """Tiled (M,K)@(K,N) + per-column affine (+ optional residual add) (+ optional ReLU)."""
    if has_res:
        a_ref, w_ref, s_ref, b_ref, r_ref, o_ref, acc_ref = refs
    else:
        a_ref, w_ref, s_ref, b_ref, o_ref, acc_ref = refs
        r_ref = None
    k = pl.program_id(2)

    @pl.when(k == 0)
    def _():
        acc_ref[...] = jnp.zeros_like(acc_ref)

    acc_ref[...] += jnp.dot(a_ref[...], w_ref[...],
                            preferred_element_type=jnp.float32)

    @pl.when(k == pl.num_programs(2) - 1)
    def _():
        y = acc_ref[...] * s_ref[...] + b_ref[...]
        if has_res:
            y = y + r_ref[...].astype(jnp.float32)
        if relu:
            y = jnp.maximum(y, 0.0)
        o_ref[...] = y.astype(o_ref.dtype)


def matmul_bn_act(a, w, scale, shift, residual, relu):
    """a:(M,Kp) bf16, w:(Kp,N) bf16 (pre-padded, N%128==0), scale/shift:(N,), residual:(M,N)|None."""
    m, kp = a.shape
    n = w.shape[1]
    tm, mp = _pick_m_tile(m)
    if mp != m:
        a = jnp.pad(a, ((0, mp - m), (0, 0)))
        if residual is not None:
            residual = jnp.pad(residual, ((0, mp - m), (0, 0)))
    tn = _pick_div_tile(n, 512)
    # v7x has 2 TensorCores sharded over the parallel grid axes; expose >= 2 parallel steps
    # for the small layer3/layer4 matmuls (no effect on 1-TC v5e/v6e).
    if mp == tm and tn == n and n >= 256 and (n // 2) % 128 == 0:
        tn = n // 2
    # Cap K tile when the N tile is wide so the worst-case block set keeps headroom under
    # v5e's 16 MiB default scoped VMEM.
    tk = _pick_div_tile(kp, 1024 if tn >= 512 else 2048)
    grid = (mp // tm, n // tn, kp // tk)

    in_specs = [
        pl.BlockSpec((tm, tk), lambda i, j, k: (i, k)),
        pl.BlockSpec((tk, tn), lambda i, j, k: (k, j)),
        pl.BlockSpec((1, tn), lambda i, j, k: (0, j)),
        pl.BlockSpec((1, tn), lambda i, j, k: (0, j)),
    ]
    args = [a, w, scale.reshape(1, n), shift.reshape(1, n)]
    if residual is not None:
        in_specs.append(pl.BlockSpec((tm, tn), lambda i, j, k: (i, j)))
        args.append(residual)

    out = pl.pallas_call(
        functools.partial(_mm_bn_act_kernel, relu=relu,
                          has_res=residual is not None),
        out_shape=jax.ShapeDtypeStruct((mp, n), jnp.bfloat16),
        grid_spec=pltpu.PrefetchScalarGridSpec(
            num_scalar_prefetch=0,
            grid=grid,
            in_specs=in_specs,
            out_specs=pl.BlockSpec((tm, tn), lambda i, j, k: (i, j)),
            scratch_shapes=[pltpu.VMEM((tm, tn), jnp.float32)],
        ),
        compiler_params=pltpu.CompilerParams(
            dimension_semantics=("parallel", "parallel", "arbitrary"),
            vmem_limit_bytes=32 * 1024 * 1024),
    )(*args)
    return out[:m] if mp != m else out


def _tap_conv_kernel(a_ref, w_ref, s_ref, b_ref, o_ref, acc_ref, *,
                     offsets, m, relu):
    """Stride-1 conv: accumulate live taps as static row-shifted windows of the flat input."""
    kc = pl.program_id(2)

    @pl.when(kc == 0)
    def _():
        acc_ref[...] = jnp.zeros_like(acc_ref)

    # Accumulate all taps into a local f32 value; one VMEM accumulator update per K step.
    off0 = offsets[0]
    y = jnp.dot(a_ref[off0:off0 + m, :], w_ref[0],
                preferred_element_type=jnp.float32)
    for t in range(1, len(offsets)):
        off = offsets[t]
        y = y + jnp.dot(a_ref[off:off + m, :], w_ref[t],
                        preferred_element_type=jnp.float32)
    acc_ref[...] += y

    @pl.when(kc == pl.num_programs(2) - 1)
    def _():
        z = acc_ref[...] * s_ref[...] + b_ref[...]
        if relu:
            z = jnp.maximum(z, 0.0)
        o_ref[...] = z.astype(o_ref.dtype)


def tap_conv_bn_act(x, w, scale, shift, *, kh, kw, dil, pad, relu):
    """Stride-1 kh x kw conv (dilation dil, padding pad) + folded BN (+ReLU), no HBM im2col.

    x: (N,H,W,C) bf16; w: (kh*kw, Cp, CoutP) bf16 with Cp/CoutP pre-padded to 128 multiples;
    scale/shift: (CoutP,) f32 (pre-padded with zeros).
    """
    n, h, wdt, c = x.shape
    cp, coutp = w.shape[1], w.shape[2]
    ho = h + 2 * pad - dil * (kh - 1)
    wo = wdt + 2 * pad - dil * (kw - 1)
    hp = h + 2 * pad
    wp = _round_up(wdt + 2 * pad, 8)         # sublane-align the ki*dil*wp tap offsets

    # Compile-time zero-tap elimination: drop taps whose entire row/column window lies inside
    # the zero padding (true for dil >= H or dil >= W, i.e. HDC layers at small feature maps).
    live = []
    for ki in range(kh):
        row_ok = (ki * dil + ho > pad) and (ki * dil < pad + h)
        for kj in range(kw):
            col_ok = (kj * dil + wo > pad) and (kj * dil < pad + wdt)
            if row_ok and col_ok:
                live.append(ki * kw + kj)
    if len(live) < kh * kw:
        if len(live) == 1:
            w = w[live[0]:live[0] + 1]
        else:
            w = jnp.concatenate([w[i:i + 1] for i in live], axis=0)
    offsets = tuple((i // kw) * dil * wp + (i % kw) * dil for i in live)

    m = ho * wp                               # "fat" rows (wrap cols sliced off afterwards)
    qp = _round_up(max(hp * wp, max(offsets) + m), 8)

    xp = jnp.pad(x, ((0, 0), (pad, pad), (pad, wp - wdt - pad), (0, cp - c)))
    xf = xp.reshape(n, hp * wp, cp)
    if qp != hp * wp:
        xf = jnp.pad(xf, ((0, 0), (0, qp - hp * wp), (0, 0)))

    tc = _pick_div_tile(cp, 1024)
    tn = _pick_div_tile(coutp, 256)
    # Grid order (cout-block, batch, cin-block): when cp == tc the weight block index is
    # constant across the batch axis, so Pallas elides the per-sample weight re-DMA.
    grid = (coutp // tn, n, cp // tc)

    out = pl.pallas_call(
        functools.partial(_tap_conv_kernel, offsets=offsets, m=m, relu=relu),
        out_shape=jax.ShapeDtypeStruct((n, m, coutp), jnp.bfloat16),
        grid_spec=pltpu.PrefetchScalarGridSpec(
            num_scalar_prefetch=0,
            grid=grid,
            in_specs=[
                pl.BlockSpec((None, qp, tc), lambda j, b, k: (b, 0, k)),
                pl.BlockSpec((len(live), tc, tn), lambda j, b, k: (0, k, j)),
                pl.BlockSpec((1, tn), lambda j, b, k: (0, j)),
                pl.BlockSpec((1, tn), lambda j, b, k: (0, j)),
            ],
            out_specs=pl.BlockSpec((None, m, tn), lambda j, b, k: (b, 0, j)),
            scratch_shapes=[pltpu.VMEM((m, tn), jnp.float32)],
        ),
        compiler_params=pltpu.CompilerParams(
            dimension_semantics=("parallel", "parallel", "arbitrary"),
            vmem_limit_bytes=32 * 1024 * 1024),
    )(xf, w, scale.reshape(1, coutp), shift.reshape(1, coutp))

    y = out.reshape(n, ho, wp, coutp)
    return y[:, :, :wo, :]


def conv1x1_bn_act(x, w, scale, shift, residual=None, *, relu, stride=1):
    """1x1 conv + BN (+ fused residual add) (+ ReLU) in NHWC bf16; returns CoutP channels."""
    if stride > 1:
        x = x[:, ::stride, ::stride, :]        # 1x1/s2 == subsample then 1x1/s1
    n, h, wd, c = x.shape
    kp, coutp = w.shape
    a = x.reshape(n * h * wd, c)
    if kp != c:
        a = jnp.pad(a, ((0, 0), (0, kp - c)))
    r = None
    if residual is not None:
        r = residual.reshape(n * h * wd, coutp)
    y = matmul_bn_act(a, w, scale, shift, r, relu)
    return y.reshape(n, h, wd, coutp)


def strided_conv_bn_act(x, w, scale, shift, *, kh, kw, stride, pad, relu):
    """Strided (dilation-1) conv via NHWC im2col -> fused matmul (stem + layer2[0] only)."""
    n, h, wd, c = x.shape
    kp, coutp = w.shape
    ho = (h + 2 * pad - kh) // stride + 1
    wo = (wd + 2 * pad - kw) // stride + 1
    xp = jnp.pad(x, ((0, 0), (pad, pad), (pad, pad), (0, 0)))
    cols = [xp[:, i:i + (ho - 1) * stride + 1:stride,
               j:j + (wo - 1) * stride + 1:stride, :]
            for i in range(kh) for j in range(kw)]
    a = jnp.concatenate(cols, axis=-1).reshape(n * ho * wo, c * kh * kw)
    if kp != c * kh * kw:
        a = jnp.pad(a, ((0, 0), (0, kp - c * kh * kw)))
    y = matmul_bn_act(a, w, scale, shift, None, relu)
    return y.reshape(n, ho, wo, coutp)


def _max9_kernel(*refs):
    o_ref = refs[-1]
    m = refs[0][...]
    for r in refs[1:-1]:
        m = jnp.maximum(m, r[...])
    o_ref[...] = m


_ELEM_TR = 256  # sublane rows (x128 lanes) per elementwise block


def maxpool_3x3_s2_p1(x):
    """3x3 / stride-2 / pad-1 max pool, NHWC (called once, tiny)."""
    n, h, w, c = x.shape
    ho = (h + 2 - 3) // 2 + 1
    wo = (w + 2 - 3) // 2 + 1
    xp = jnp.pad(x, ((0, 0), (1, 1), (1, 1), (0, 0)),
                 constant_values=-jnp.inf)
    views = [xp[:, i:i + (ho - 1) * 2 + 1:2, j:j + (wo - 1) * 2 + 1:2, :]
             .reshape(-1) for i in range(3) for j in range(3)]
    L = views[0].size
    Lp = _round_up(L, 128 * _ELEM_TR)
    rows = Lp // 128
    mats = [jnp.pad(v, (0, Lp - L), constant_values=-jnp.inf)
            .reshape(rows, 128) for v in views]
    out = pl.pallas_call(
        _max9_kernel,
        out_shape=jax.ShapeDtypeStruct((rows, 128), x.dtype),
        grid=(rows // _ELEM_TR,),
        in_specs=[pl.BlockSpec((_ELEM_TR, 128), lambda i: (i, 0))
                  for _ in range(9)],
        out_specs=pl.BlockSpec((_ELEM_TR, 128), lambda i: (i, 0)),
    )(*mats)
    return out.reshape(-1)[:L].reshape(n, ho, wo, c)


# ---------------------------------------------------------------------------
# Parameters: deterministic synthetic init + one-time preparation into matmul layouts
# (BN folded, K and Cout pre-padded to 128 multiples for lane-dense MXU operands/outputs).
# ---------------------------------------------------------------------------

class _Keys:
    def __init__(self, key):
        self._key = key
        self._i = 0

    def next(self):
        self._i += 1
        return jax.random.fold_in(self._key, self._i)


def _conv_w(kg, cout, cin, kh, kw):
    fan_in = cin * kh * kw
    std = 0.5 * (2.0 / fan_in) ** 0.5
    return std * jax.random.normal(kg.next(), (cout, cin, kh, kw), jnp.float32)


def _bn(c):
    return dict(gamma=jnp.ones((c,), jnp.float32),
                beta=jnp.zeros((c,), jnp.float32),
                mean=jnp.zeros((c,), jnp.float32),
                var=jnp.ones((c,), jnp.float32))


def _fold_bn(bn, bias=None, eps=1e-5):
    scale = bn['gamma'] / jnp.sqrt(bn['var'] + eps)
    shift = bn['beta'] - bn['mean'] * scale
    if bias is not None:
        shift = shift + bias * scale
    return scale, shift


def _pad_affine(scale, shift, coutp):
    c = scale.shape[0]
    if coutp == c:
        return scale, shift
    return jnp.pad(scale, (0, coutp - c)), jnp.pad(shift, (0, coutp - c))


def _prep_w_1x1(w):                      # (Cout,Cin,1,1) -> (Kp, CoutP) bf16
    cout, cin = w.shape[0], w.shape[1]
    kp = _round_up(cin, 128)
    cq = _round_up(cout, 128)
    w2 = jnp.pad(w.reshape(cout, cin).T, ((0, kp - cin), (0, cq - cout)))
    return w2.astype(jnp.bfloat16)


def _prep_w_tap(w):                      # (Cout,Cin,kh,kw) -> (kh*kw, Cp, CoutP) bf16
    cout, cin, kh, kw = w.shape
    cp = _round_up(cin, 128)
    cq = _round_up(cout, 128)
    wt = w.transpose(2, 3, 1, 0).reshape(kh * kw, cin, cout)
    wt = jnp.pad(wt, ((0, 0), (0, cp - cin), (0, cq - cout)))
    return wt.astype(jnp.bfloat16)


def _prep_w_im2col(w):                   # (Cout,Cin,kh,kw) -> (Kp, CoutP) bf16, K = (tap, cin)
    cout, cin, kh, kw = w.shape
    k = cin * kh * kw
    kp = _round_up(k, 128)
    cq = _round_up(cout, 128)
    w2 = jnp.pad(w.transpose(2, 3, 1, 0).reshape(k, cout),
                 ((0, kp - k), (0, cq - cout)))
    return w2.astype(jnp.bfloat16)


def _make_bottleneck(kg, inplanes, planes, conv2_stride, has_ds):
    w1 = _conv_w(kg, planes, inplanes, 1, 1)
    w2 = _conv_w(kg, planes, planes, 3, 3)
    w3 = _conv_w(kg, planes * 4, planes, 1, 1)
    p = dict(w1=_prep_w_1x1(w1),
             w2=_prep_w_tap(w2) if conv2_stride == 1 else _prep_w_im2col(w2),
             w3=_prep_w_1x1(w3))
    p['s1'], p['b1'] = _pad_affine(*_fold_bn(_bn(planes)), _round_up(planes, 128))
    p['s2'], p['b2'] = _pad_affine(*_fold_bn(_bn(planes)), _round_up(planes, 128))
    p['s3'], p['b3'] = _pad_affine(*_fold_bn(_bn(planes * 4)), _round_up(planes * 4, 128))
    if has_ds:
        p['wds'] = _prep_w_1x1(_conv_w(kg, planes * 4, inplanes, 1, 1))
        p['sds'], p['bds'] = _pad_affine(*_fold_bn(_bn(planes * 4)),
                                         _round_up(planes * 4, 128))
    return p


def _make_layer(kg, inplanes, planes, nblocks, first_stride):
    blocks = []
    for i in range(nblocks):
        cin = inplanes if i == 0 else planes * 4
        blocks.append(_make_bottleneck(
            kg, cin, planes,
            conv2_stride=(first_stride if i == 0 else 1),
            has_ds=(i == 0)))
    return blocks


def _make_duc(kg, upfactor, inplanes, outplanes):
    up = upfactor * upfactor * outplanes
    w = _conv_w(kg, up, inplanes, 3, 3)
    bias = 0.01 * jax.random.normal(kg.next(), (up,), jnp.float32)
    s, b = _fold_bn(_bn(up), bias=bias)
    s, b = _pad_affine(s, b, _round_up(up, 128))
    return dict(w=_prep_w_tap(w), s=s, b=b)


LAYER3_DIL = [1, 2, 5, 9]
LAYER4_DIL = [5, 9, 17]


def init_params(key, num_classes):
    kg = _Keys(key)
    p = dict(w0=_prep_w_im2col(_conv_w(kg, 64, 3, 7, 7)))
    p['s0'], p['b0'] = _pad_affine(*_fold_bn(_bn(64)), 128)
    p['layer1'] = _make_layer(kg, 64, 64, 3, first_stride=1)
    p['layer2'] = _make_layer(kg, 256, 128, 8, first_stride=2)
    p['layer3'] = _make_layer(kg, 512, 256, 36, first_stride=1)
    p['layer4'] = _make_layer(kg, 1024, 512, 3, first_stride=1)
    p['duc1'] = _make_duc(kg, 1, 2048, 512)
    p['duc2'] = _make_duc(kg, 4, 1024, 64)
    p['duc3'] = _make_duc(kg, 2, 128, num_classes)
    return p


# ---------------------------------------------------------------------------
# Model forward (NHWC bf16 internally).  Jitted at the bottleneck / DUC granularity so all
# 50 residual blocks reuse ~12 compiled programs while the in-graph pads/slices stay fused.
# ---------------------------------------------------------------------------

@jax.jit
def _stem_pool(x_nchw, w0, s0, b0):
    x = jnp.transpose(x_nchw, (0, 2, 3, 1)).astype(jnp.bfloat16)   # NCHW -> NHWC bf16
    y = strided_conv_bn_act(x, w0, s0, b0, kh=7, kw=7, stride=2, pad=3, relu=True)
    x0 = y[..., :64]                       # drop the lane-padding channels of the stem
    return x0, maxpool_3x3_s2_p1(x0)


@functools.partial(jax.jit, static_argnames=("conv2_stride", "dilation", "ds_stride"))
def _bottleneck_fwd(x, p, *, conv2_stride, dilation, ds_stride):
    out = conv1x1_bn_act(x, p['w1'], p['s1'], p['b1'], relu=True)
    if conv2_stride == 1:
        out = tap_conv_bn_act(out, p['w2'], p['s2'], p['b2'],
                              kh=3, kw=3, dil=dilation, pad=dilation, relu=True)
    else:
        out = strided_conv_bn_act(out, p['w2'], p['s2'], p['b2'],
                                  kh=3, kw=3, stride=conv2_stride, pad=dilation,
                                  relu=True)
    if 'wds' in p:
        identity = conv1x1_bn_act(x, p['wds'], p['sds'], p['bds'],
                                  relu=False, stride=ds_stride)
    else:
        identity = x
    # conv3 + BN + residual add + ReLU fused in a single Pallas epilogue.
    return conv1x1_bn_act(out, p['w3'], p['s3'], p['b3'],
                          residual=identity, relu=True)


def _pixel_shuffle_nhwc(x, r):
    if r == 1:
        return x
    n, h, w, c = x.shape
    co = c // (r * r)
    x = x.reshape(n, h, w, co, r, r)
    x = x.transpose(0, 1, 4, 2, 5, 3)
    return x.reshape(n, h * r, w * r, co)


@functools.partial(jax.jit, static_argnames=("r", "up_ch"))
def _duc_apply(x, p, *, r, up_ch):
    y = tap_conv_bn_act(x, p['w'], p['s'], p['b'],
                        kh=3, kw=3, dil=1, pad=1, relu=True)
    return _pixel_shuffle_nhwc(y[..., :up_ch], r)


@functools.partial(jax.jit, static_argnames=("r", "up_ch"))
def _duc_block_apply(x1, x2, p, *, r, up_ch):
    # Faithful to the reference: F.pad(x2, (dX//2, dX/2, dY//2, dY/2)), where dX is the
    # H-size difference but the first pair pads W (and vice versa); the swap is reproduced.
    dX = x1.shape[1] - x2.shape[1]
    dY = x1.shape[2] - x2.shape[2]
    x2 = jnp.pad(x2, ((0, 0), (dY // 2, int(dY / 2)), (dX // 2, int(dX / 2)), (0, 0)))
    x = jnp.concatenate([x2, x1], axis=-1)
    return _duc_apply(x, p, r=r, up_ch=up_ch)


def resnet_duc_hdc_forward(params, x_nchw, *, num_classes):
    x0, h = _stem_pool(x_nchw, params['w0'], params['s0'], params['b0'])
    for blk in params['layer1']:
        h = _bottleneck_fwd(h, blk, conv2_stride=1, dilation=1, ds_stride=1)
    for i, blk in enumerate(params['layer2']):
        h = _bottleneck_fwd(h, blk, conv2_stride=(2 if i == 0 else 1),
                            dilation=1, ds_stride=2)
    x2 = h
    for i, blk in enumerate(params['layer3']):   # HDC dilations [1,2,5,9], stride forced to 1
        h = _bottleneck_fwd(h, blk, conv2_stride=1,
                            dilation=LAYER3_DIL[i % 4], ds_stride=1)
    for i, blk in enumerate(params['layer4']):   # dilations [5,9,17], stride forced to 1
        h = _bottleneck_fwd(h, blk, conv2_stride=1,
                            dilation=LAYER4_DIL[i], ds_stride=1)
    x4 = h

    y = _duc_apply(x4, params['duc1'], r=1, up_ch=512)                 # _DUC(1, 2048, 512)
    y = _duc_block_apply(y, x2, params['duc2'], r=4, up_ch=1024)       # DUCBlock(4, 1024, 64)
    y = _duc_block_apply(y, x0, params['duc3'], r=2,
                         up_ch=4 * num_classes)                        # DUCBlock(2, 128, ncls)
    return jnp.transpose(y, (0, 3, 1, 2)).astype(jnp.float32)          # back to NCHW f32


if __name__ == "__main__":
    num_classes = 5
    key = jax.random.PRNGKey(0)
    k_param, k_x = jax.random.split(key)
    params = init_params(k_param, num_classes)
    x = jax.random.normal(k_x, (2, 3, 64, 64), jnp.float32)

    out = resnet_duc_hdc_forward(params, x, num_classes=num_classes)
    out = jax.block_until_ready(out)

    assert out.shape == (2, num_classes, 64, 64), out.shape
    assert bool(jnp.isfinite(out).all())
    print("KERNEL_OK")
</pallas_src>

<mosaic_0001>
module attributes {stable_mosaic.version = 11 : i64} {
  func.func @_mm_bn_act_kernel(%arg0: i32, %arg1: i32, %arg2: i32, %arg3: memref<256x256xbf16, #tpu.memory_space<vmem>>, %arg4: memref<256x128xbf16, #tpu.memory_space<vmem>>, %arg5: memref<1x128xf32, #tpu.memory_space<vmem>>, %arg6: memref<1x128xf32, #tpu.memory_space<vmem>>, %arg7: memref<256x128xbf16, #tpu.memory_space<vmem>>, %arg8: memref<256x128xf32, #tpu.memory_space<vmem>>) attributes {dimension_semantics = [#tpu.dimension_semantics<parallel>, #tpu.dimension_semantics<parallel>, #tpu.dimension_semantics<arbitrary>], iteration_bounds = array<i64: 8, 1, 1>, scalar_prefetch = 0 : i64, scratch_operands = 1 : i64, tpu.core_type = #tpu.core_type<tc>, window_params = [{transform_indices = @transform_0, window_bounds = array<i64: 256, 256>}, {transform_indices = @transform_1, window_bounds = array<i64: 256, 128>}, {transform_indices = @transform_2, window_bounds = array<i64: 1, 128>}, {transform_indices = @transform_3, window_bounds = array<i64: 1, 128>}, {transform_indices = @transform_4, window_bounds = array<i64: 256, 128>}]} {
    %c0_i32 = arith.constant 0 : i32
    %0 = arith.cmpi eq, %arg2, %c0_i32 : i32
    %1 = arith.extui %0 : i1 to i32
    %c0_i32_0 = arith.constant 0 : i32
    %2 = arith.cmpi ne, %1, %c0_i32_0 : i32
    scf.if %2 {
      %cst_10 = arith.constant 0.000000e+00 : f32
      %12 = vector.broadcast %cst_10 : f32 to vector<256x128xf32>
      %c0_11 = arith.constant 0 : index
      %c0_12 = arith.constant 0 : index
      %13 = vector.load %arg8[%c0_11, %c0_12] : memref<256x128xf32, #tpu.memory_space<vmem>>, vector<256x128xf32>
      tpu.vector_store %arg8[%c0_11, %c0_12], %12 {strides = array<i32>} : memref<256x128xf32, #tpu.memory_space<vmem>>, vector<256x128xf32>,
    } else {
    }
    %c0 = arith.constant 0 : index
    %c0_1 = arith.constant 0 : index
    %3 = vector.load %arg8[%c0, %c0_1] : memref<256x128xf32, #tpu.memory_space<vmem>>, vector<256x128xf32>
    %c0_2 = arith.constant 0 : index
    %c0_3 = arith.constant 0 : index
    %4 = vector.load %arg3[%c0_2, %c0_3] : memref<256x256xbf16, #tpu.memory_space<vmem>>, vector<256x256xbf16>
    %c0_4 = arith.constant 0 : index
    %c0_5 = arith.constant 0 : index
    %5 = vector.load %arg4[%c0_4, %c0_5] : memref<256x128xbf16, #tpu.memory_space<vmem>>, vector<256x128xbf16>
    %cst = arith.constant dense<0.000000e+00> : vector<256x128xf32>
    %6 = tpu.matmul %4, %5, %cst {dimension_numbers = #tpu.dot_dimension_numbers<[1], [0], [0], [1], [0, 0, 1, 1], [], []>} : vector<256x256xbf16>, vector<256x128xbf16>, vector<256x128xf32> -> vector<256x128xf32>
    %7 = arith.addf %3, %6 : vector<256x128xf32>
    %c0_6 = arith.constant 0 : index
    %c0_7 = arith.constant 0 : index
    %8 = vector.load %arg8[%c0_6, %c0_7] : memref<256x128xf32, #tpu.memory_space<vmem>>, vector<256x128xf32>
    tpu.vector_store %arg8[%c0_6, %c0_7], %7 {strides = array<i32>} : memref<256x128xf32, #tpu.memory_space<vmem>>, vector<256x128xf32>,
    %c0_i32_8 = arith.constant 0 : i32
    %9 = arith.cmpi eq, %arg2, %c0_i32_8 : i32
    %10 = arith.extui %9 : i1 to i32
    %c0_i32_9 = arith.constant 0 : i32
    %11 = arith.cmpi ne, %10, %c0_i32_9 : i32
    scf.if %11 {
      %c0_10 = arith.constant 0 : index
      %c0_11 = arith.constant 0 : index
      %12 = vector.load %arg8[%c0_10, %c0_11] : memref<256x128xf32, #tpu.memory_space<vmem>>, vector<256x128xf32>
      %c0_12 = arith.constant 0 : index
      %c0_13 = arith.constant 0 : index
      %13 = vector.load %arg5[%c0_12, %c0_13] : memref<1x128xf32, #tpu.memory_space<vmem>>, vector<1x128xf32>
      %14 = vector.broadcast %13 : vector<1x128xf32> to vector<256x128xf32>
      %15 = arith.mulf %12, %14 : vector<256x128xf32>
      %c0_14 = arith.constant 0 : index
      %c0_15 = arith.constant 0 : index
      %16 = vector.load %arg6[%c0_14, %c0_15] : memref<1x128xf32, #tpu.memory_space<vmem>>, vector<1x128xf32>
      %17 = vector.broadcast %16 : vector<1x128xf32> to vector<256x128xf32>
      %18 = arith.addf %15, %17 : vector<256x128xf32>
      %cst_16 = arith.constant 0.000000e+00 : f32
      %19 = vector.broadcast %cst_16 : f32 to vector<256x128xf32>
      %20 = arith.maximumf %18, %19 : vector<256x128xf32>
      %21 = arith.truncf %20 : vector<256x128xf32> to vector<256x128xbf16>
      %c0_17 = arith.constant 0 : index
      %c0_18 = arith.constant 0 : index
      %22 = vector.load %arg7[%c0_17, %c0_18] : memref<256x128xbf16, #tpu.memory_space<vmem>>, vector<256x128xbf16>
      tpu.vector_store %arg7[%c0_17, %c0_18], %21 {strides = array<i32>} : memref<256x128xbf16, #tpu.memory_space<vmem>>, vector<256x128xbf16>,
    } else {
    }
    return
  }
  func.func @transform_0(%arg0: i32, %arg1: i32, %arg2: i32) -> (i32, i32) {
    %c0_i32 = arith.constant 0 : i32
    return %arg0, %arg2 : i32, i32
  }
  func.func @transform_1(%arg0: i32, %arg1: i32, %arg2: i32) -> (i32, i32) {
    %c0_i32 = arith.constant 0 : i32
    return %arg2, %arg1 : i32, i32
  }
  func.func @transform_2(%arg0: i32, %arg1: i32, %arg2: i32) -> (i32, i32) {
    %c0_i32 = arith.constant 0 : i32
    %c0_i32_0 = arith.constant 0 : i32
    return %c0_i32, %arg1 : i32, i32
  }
  func.func @transform_3(%arg0: i32, %arg1: i32, %arg2: i32) -> (i32, i32) {
    %c0_i32 = arith.constant 0 : i32
    %c0_i32_0 = arith.constant 0 : i32
    return %c0_i32, %arg1 : i32, i32
  }
  func.func @transform_4(%arg0: i32, %arg1: i32, %arg2: i32) -> (i32, i32) {
    %c0_i32 = arith.constant 0 : i32
    return %arg0, %arg1 : i32, i32
  }
}

module attributes {stable_mosaic.version = 11 : i64} {
  func.func @_max9_kernel(%arg0: i32, %arg1: memref<256x128xbf16, #tpu.memory_space<vmem>>, %arg2: memref<256x128xbf16, #tpu.memory_space<vmem>>, %arg3: memref<256x128xbf16, #tpu.memory_space<vmem>>, %arg4: memref<256x128xbf16, #tpu.memory_space<vmem>>, %arg5: memref<256x128xbf16, #tpu.memory_space<vmem>>, %arg6: memref<256x128xbf16, #tpu.memory_space<vmem>>, %arg7: memref<256x128xbf16, #tpu.memory_space<vmem>>, %arg8: memref<256x128xbf16, #tpu.memory_space<vmem>>, %arg9: memref<256x128xbf16, #tpu.memory_space<vmem>>, %arg10: memref<256x128xbf16, #tpu.memory_space<vmem>>) attributes {dimension_semantics = [#tpu.dimension_semantics<arbitrary>], iteration_bounds = array<i64: 1>, scalar_prefetch = 0 : i64, scratch_operands = 0 : i64, tpu.core_type = #tpu.core_type<tc>, window_params = [{transform_indices = @transform_0, window_bounds = array<i64: 256, 128>}, {transform_indices = @transform_1, window_bounds = array<i64: 256, 128>}, {transform_indices = @transform_2, window_bounds = array<i64: 256, 128>}, {transform_indices = @transform_3, window_bounds = array<i64: 256, 128>}, {transform_indices = @transform_4, window_bounds = array<i64: 256, 128>}, {transform_indices = @transform_5, window_bounds = array<i64: 256, 128>}, {transform_indices = @transform_6, window_bounds = array<i64: 256, 128>}, {transform_indices = @transform_7, window_bounds = array<i64: 256, 128>}, {transform_indices = @transform_8, window_bounds = array<i64: 256, 128>}, {transform_indices = @transform_9, window_bounds = array<i64: 256, 128>}]} {
    %c0 = arith.constant 0 : index
    %c0_0 = arith.constant 0 : index
    %0 = vector.load %arg1[%c0, %c0_0] : memref<256x128xbf16, #tpu.memory_space<vmem>>, vector<256x128xbf16>
    %c0_1 = arith.constant 0 : index
    %c0_2 = arith.constant 0 : index
    %1 = vector.load %arg2[%c0_1, %c0_2] : memref<256x128xbf16, #tpu.memory_space<vmem>>, vector<256x128xbf16>
    %2 = arith.maximumf %0, %1 : vector<256x128xbf16>
    %c0_3 = arith.constant 0 : index
    %c0_4 = arith.constant 0 : index
    %3 = vector.load %arg3[%c0_3, %c0_4] : memref<256x128xbf16, #tpu.memory_space<vmem>>, vector<256x128xbf16>
    %4 = arith.maximumf %2, %3 : vector<256x128xbf16>
    %c0_5 = arith.constant 0 : index
    %c0_6 = arith.constant 0 : index
    %5 = vector.load %arg4[%c0_5, %c0_6] : memref<256x128xbf16, #tpu.memory_space<vmem>>, vector<256x128xbf16>
    %6 = arith.maximumf %4, %5 : vector<256x128xbf16>
    %c0_7 = arith.constant 0 : index
    %c0_8 = arith.constant 0 : index
    %7 = vector.load %arg5[%c0_7, %c0_8] : memref<256x128xbf16, #tpu.memory_space<vmem>>, vector<256x128xbf16>
    %8 = arith.maximumf %6, %7 : vector<256x128xbf16>
    %c0_9 = arith.constant 0 : index
    %c0_10 = arith.constant 0 : index
    %9 = vector.load %arg6[%c0_9, %c0_10] : memref<256x128xbf16, #tpu.memory_space<vmem>>, vector<256x128xbf16>
    %10 = arith.maximumf %8, %9 : vector<256x128xbf16>
    %c0_11 = arith.constant 0 : index
    %c0_12 = arith.constant 0 : index
    %11 = vector.load %arg7[%c0_11, %c0_12] : memref<256x128xbf16, #tpu.memory_space<vmem>>, vector<256x128xbf16>
    %12 = arith.maximumf %10, %11 : vector<256x128xbf16>
    %c0_13 = arith.constant 0 : index
    %c0_14 = arith.constant 0 : index
    %13 = vector.load %arg8[%c0_13, %c0_14] : memref<256x128xbf16, #tpu.memory_space<vmem>>, vector<256x128xbf16>
    %14 = arith.maximumf %12, %13 : vector<256x128xbf16>
    %c0_15 = arith.constant 0 : index
    %c0_16 = arith.constant 0 : index
    %15 = vector.load %arg9[%c0_15, %c0_16] : memref<256x128xbf16, #tpu.memory_space<vmem>>, vector<256x128xbf16>
    %16 = arith.maximumf %14, %15 : vector<256x128xbf16>
    %c0_17 = arith.constant 0 : index
    %c0_18 = arith.constant 0 : index
    %17 = vector.load %arg10[%c0_17, %c0_18] : memref<256x128xbf16, #tpu.memory_space<vmem>>, vector<256x128xbf16>
    tpu.vector_store %arg10[%c0_17, %c0_18], %16 {strides = array<i32>} : memref<256x128xbf16, #tpu.memory_space<vmem>>, vector<256x128xbf16>,
    return
  }
  func.func @transform_0(%arg0: i32) -> (i32, i32) {
    %c0_i32 = arith.constant 0 : i32
    %c0_i32_0 = arith.constant 0 : i32
    return %arg0, %c0_i32 : i32, i32
  }
  func.func @transform_1(%arg0: i32) -> (i32, i32) {
    %c0_i32 = arith.constant 0 : i32
    %c0_i32_0 = arith.constant 0 : i32
    return %arg0, %c0_i32 : i32, i32
  }
  func.func @transform_2(%arg0: i32) -> (i32, i32) {
    %c0_i32 = arith.constant 0 : i32
    %c0_i32_0 = arith.constant 0 : i32
    return %arg0, %c0_i32 : i32, i32
  }
  func.func @transform_3(%arg0: i32) -> (i32, i32) {
    %c0_i32 = arith.constant 0 : i32
    %c0_i32_0 = arith.constant 0 : i32
    return %arg0, %c0_i32 : i32, i32
  }
  func.func @transform_4(%arg0: i32) -> (i32, i32) {
    %c0_i32 = arith.constant 0 : i32
    %c0_i32_0 = arith.constant 0 : i32
    return %arg0, %c0_i32 : i32, i32
  }
  func.func @transform_5(%arg0: i32) -> (i32, i32) {
    %c0_i32 = arith.constant 0 : i32
    %c0_i32_0 = arith.constant 0 : i32
    return %arg0, %c0_i32 : i32, i32
  }
  func.func @transform_6(%arg0: i32) -> (i32, i32) {
    %c0_i32 = arith.constant 0 : i32
    %c0_i32_0 = arith.constant 0 : i32
    return %arg0, %c0_i32 : i32, i32
  }
  func.func @transform_7(%arg0: i32) -> (i32, i32) {
    %c0_i32 = arith.constant 0 : i32
    %c0_i32_0 = arith.constant 0 : i32
    return %arg0, %c0_i32 : i32, i32
  }
  func.func @transform_8(%arg0: i32) -> (i32, i32) {
    %c0_i32 = arith.constant 0 : i32
    %c0_i32_0 = arith.constant 0 : i32
    return %arg0, %c0_i32 : i32, i32
  }
  func.func @transform_9(%arg0: i32) -> (i32, i32) {
    %c0_i32 = arith.constant 0 : i32
    %c0_i32_0 = arith.constant 0 : i32
    return %arg0, %c0_i32 : i32, i32
  }
}

</mosaic_0001>

<llo_original>
// kernel: _stem_pool.2
$region0: #{_stem_pool.2}
  #allocation0 [shape = 'u32[]', space=smem, size = 0x4, offset = 0x4, fixed_abs, tag = 'smem constant byte address 0x4 - core index']
  #allocation1 [shape = 'u32[144,128]{1,0:T(1,128)}', space=vmem, size = 0x12000, scoped, tag = 'internal scratch']
  #allocation2 [shape = 'f32[256,128]{1,0:T(8,128)}', space=vmem, size = 0x20000, scoped, tag = 'scratch operand']
  %s0 = inlined_call_operand.vmem [shape: bf16[2048,256], index: 0, kind: input, shape index: {}]
  %s1 = inlined_call_operand.vmem [shape: bf16[256,128], index: 1, kind: input, shape index: {}]
  %s2 = inlined_call_operand.vmem [shape: f32[1,128], index: 2, kind: input, shape index: {}]
  %s3 = inlined_call_operand.vmem [shape: f32[1,128], index: 3, kind: input, shape index: {}]
  %s4 = inlined_call_operand.vmem [shape: bf16[2048,128], index: 4, kind: output, shape index: {}]
  %s5 = sld [smem:[#allocation0]]
  $region57: #{_stem_pool.2} parent=0
    _
  %s7 = ssub.s32 1, %s5
  %s8 = scalar_select 0, %s7, %s5
  loop: start=0, step=1, limit=10
  $region2: #{_stem_pool.2} parent=0 // loop_pre_header
    _
  $region3: #{_stem_pool.2} parent=0 // loop_header
    %s10 = sphi 0, %s14
    %p11 = scmp.ge.s32.totalorder %s10, 10
    %s17 = sphi 0, %s36
    %s18 = sphi 0, %s32
    %s19 = sphi 0, %s28
    %s20 = sphi 0, %s17
    %s21 = sphi 0, %s18
    %s22 = sphi 0, %s19
    %s23 = sphi 0, %s20
    %s24 = sphi 0, %s21
    %s25 = sphi 0, %s22
    %s41 = sphi 0, %s43
    %s44 = sphi 0, %s41
    %s45 = sphi 0, %s44
    %s61 = sphi 0, %s45
    %s69 = sphi 0, %s71
    %s72 = sphi 0, %s69
    %s73 = sphi 0, %s72
    %s89 = sphi 0, %s73
    %s95 = sphi 0, %s97
    %s98 = sphi 0, %s95
    %s99 = sphi 0, %s98
    %s115 = sphi 0, %s99
    %s121 = sphi 0, %s123
    %s124 = sphi 0, %s121
    %s125 = sphi 0, %s124
    %s141 = sphi 0, %s125
    %s149 = sphi 0, %s151
    %s152 = sphi 0, %s149
    %s153 = sphi 0, %s152
    %s169 = sphi 0, %s153
  $region4: #{_stem_pool.2} parent=0 // loop_header_branch
    %13 = sbr.rel (%p11) target = $region8
  $region5: #{_stem_pool.2} parent=0 // loop_body
    %s15 = ssub.s32 %s10, 1
    %s16 = ssub.s32 %s10, 2
    %s26 = sadd.s32 1, %s19
    %p27 = scmp.ge.s32.totalorder %s26, 1
    %s28 = scalar_select %p27, 0, %s26
    %s29 = sadd.s32 1, %s18
    %s30 = scalar_select %p27, %s29, %s18
    %p31 = scmp.ge.s32.totalorder %s30, 1
    %s32 = scalar_select %p31, 0, %s30
    %s33 = sadd.s32 1, %s17
    %s34 = scalar_select %p31, %s33, %s17
    %p35 = scmp.ge.s32.totalorder %s34, 8
    %s36 = scalar_select %p35, 0, %s34
    %s37 = ssub.s32 %s17, %s36
    %s38 = ssub.s32 %s19, %s28
    %s39 = sor.u32 %s37, %s38
    %p40 = scmp.eq.s32.totalorder %s39, 0
    %s42 = sadd.s32 %s41, 1
    %s43 = scalar_select %p40, %s41, %s42
    %p46 = pneg %p40
    %p47 = scmp.eq.s32.totalorder %s10, 7
    %p48 = por %p46, %p47
    %p49 = scmp.ne.s32.totalorder %s41, %s44
    %p50 = scmp.eq.s32.totalorder %s10, 0
    %p51 = por %p49, %p50
    %p52 = scmp.ne.s32.totalorder %s41, %s44
    %p53 = scmp.eq.s32.totalorder %s15, 7
    %p54 = por %p52, %p53
    %p55 = scmp.ne.s32.totalorder %s44, %s45
    %p56 = scmp.eq.s32.totalorder %s15, 0
    %p57 = por %p55, %p56
    %p58 = scmp.ne.s32.totalorder %s44, %s45
    %p59 = scmp.eq.s32.totalorder %s16, 7
    %p60 = por %p58, %p59
    %p62 = scmp.ne.s32.totalorder %s45, %s61
    %p63 = scmp.eq.s32.totalorder %s16, 0
    %p64 = por %p62, %p63
    %s65 = ssub.s32 %s19, %s28
    %s66 = ssub.s32 %s18, %s32
    %s67 = sor.u32 %s65, %s66
    %p68 = scmp.eq.s32.totalorder %s67, 0
    %s70 = sadd.s32 %s69, 1
    %s71 = scalar_select %p68, %s69, %s70
    %p74 = pneg %p68
    %p75 = scmp.eq.s32.totalorder %s10, 7
    %p76 = por %p74, %p75
    %p77 = scmp.ne.s32.totalorder %s69, %s72
    %p78 = scmp.eq.s32.totalorder %s10, 0
    %p79 = por %p77, %p78
    %p80 = scmp.ne.s32.totalorder %s69, %s72
    %p81 = scmp.eq.s32.totalorder %s15, 7
    %p82 = por %p80, %p81
    %p83 = scmp.ne.s32.totalorder %s72, %s73
    %p84 = scmp.eq.s32.totalorder %s15, 0
    %p85 = por %p83, %p84
    %p86 = scmp.ne.s32.totalorder %s72, %s73
    %p87 = scmp.eq.s32.totalorder %s16, 7
    %p88 = por %p86, %p87
    %p90 = scmp.ne.s32.totalorder %s73, %s89
    %p91 = scmp.eq.s32.totalorder %s16, 0
    %p92 = por %p90, %p91
    %s93 = ssub.s32 %s18, %s32
    %p94 = scmp.eq.s32.totalorder %s93, 0
    %s96 = sadd.s32 %s95, 1
    %s97 = scalar_select %p94, %s95, %s96
    %p100 = pneg %p94
    %p101 = scmp.eq.s32.totalorder %s10, 7
    %p102 = por %p100, %p101
    %p103 = scmp.ne.s32.totalorder %s95, %s98
    %p104 = scmp.eq.s32.totalorder %s10, 0
    %p105 = por %p103, %p104
    %p106 = scmp.ne.s32.totalorder %s95, %s98
    %p107 = scmp.eq.s32.totalorder %s15, 7
    %p108 = por %p106, %p107
    %p109 = scmp.ne.s32.totalorder %s98, %s99
    %p110 = scmp.eq.s32.totalorder %s15, 0
    %p111 = por %p109, %p110
    %p112 = scmp.ne.s32.totalorder %s98, %s99
    %p113 = scmp.eq.s32.totalorder %s16, 7
    %p114 = por %p112, %p113
    %p116 = scmp.ne.s32.totalorder %s99, %s115
    %p117 = scmp.eq.s32.totalorder %s16, 0
    %p118 = por %p116, %p117
    %s119 = ssub.s32 %s18, %s32
    %p120 = scmp.eq.s32.totalorder %s119, 0
    %s122 = sadd.s32 %s121, 1
    %s123 = scalar_select %p120, %s121, %s122
    %p126 = pneg %p120
    %p127 = scmp.eq.s32.totalorder %s10, 7
    %p128 = por %p126, %p127
    %p129 = scmp.ne.s32.totalorder %s121, %s124
    %p130 = scmp.eq.s32.totalorder %s10, 0
    %p131 = por %p129, %p130
    %p132 = scmp.ne.s32.totalorder %s121, %s124
    %p133 = scmp.eq.s32.totalorder %s15, 7
    %p134 = por %p132, %p133
    %p135 = scmp.ne.s32.totalorder %s124, %s125
    %p136 = scmp.eq.s32.totalorder %s15, 0
    %p137 = por %p135, %p136
    %p138 = scmp.ne.s32.totalorder %s124, %s125
    %p139 = scmp.eq.s32.totalorder %s16, 7
    %p140 = por %p138, %p139
    %p142 = scmp.ne.s32.totalorder %s125, %s141
    %p143 = scmp.eq.s32.totalorder %s16, 0
    %p144 = por %p142, %p143
    %s145 = ssub.s32 %s17, %s36
    %s146 = ssub.s32 %s18, %s32
    %s147 = sor.u32 %s145, %s146
    %p148 = scmp.eq.s32.totalorder %s147, 0
    %s150 = sadd.s32 %s149, 1
    %s151 = scalar_select %p148, %s149, %s150
    %p154 = pneg %p148
    %p155 = scmp.eq.s32.totalorder %s10, 7
    %p156 = por %p154, %p155
    %p157 = scmp.ne.s32.totalorder %s149, %s152
    %p158 = scmp.eq.s32.totalorder %s10, 0
    %p159 = por %p157, %p158
    %p160 = scmp.ne.s32.totalorder %s149, %s152
    %p161 = scmp.eq.s32.totalorder %s15, 7
    %p162 = por %p160, %p161
    %p163 = scmp.ne.s32.totalorder %s152, %s153
    %p164 = scmp.eq.s32.totalorder %s15, 0
    %p165 = por %p163, %p164
    %p166 = scmp.ne.s32.totalorder %s152, %s153
    %p167 = scmp.eq.s32.totalorder %s16, 7
    %p168 = por %p166, %p167
    %p170 = scmp.ne.s32.totalorder %s153, %s169
    %p171 = scmp.eq.s32.totalorder %s16, 0
    %p172 = por %p170, %p171
    %p173 = scmp.le.s32.totalorder 1, %s10
    %p174 = scmp.lt.s32.totalorder %s10, 9
    %p175 = pnand %p173, %p174
    %p176 = pneg %p175
    // Predicated region
    $region9: #{_stem_pool.2} parent=5 // pred_check
      _
    $region10: #{_stem_pool.2} parent=5 // pred_check_branch
      %178 = sbr.rel (%p175) target = $region12
    $region11: #{_stem_pool.2} parent=5 // pred_region
      %s179 = ssub.s32 %s10, 1
      // Predicated region
      $region13: #{_stem_pool.2} parent=11 // pred_check
        %p180 = pneg %p85
      $region14: #{_stem_pool.2} parent=11 // pred_check_branch
        %182 = sbr.rel (%p180) target = $region16
      $region15: #{_stem_pool.2} parent=11 // pred_region
        %s183 = smul.u32 32, %s22
        %p184 = scmp.lt.s32.totalorder %s183, 31
        %s185 = scalar_select %p184, %s183, 31
        %p186 = scmp.lt.s32.totalorder %s21, 0
        %s187 = scalar_select %p186, %s21, 0
        %s188 = sadd.s32 %s187, %s185
        %s189 = smul.addr %s188, 4
        %s190 = scalar_lea.vmem %s1, %s189
        %s191 = smul.u32 32, %s22
      $region16: #{_stem_pool.2} parent=11 // pred_fallthru
        _
      // Predicated region
      $region17: #{_stem_pool.2} parent=11 // pred_check
        %p192 = pneg %p111
      $region18: #{_stem_pool.2} parent=11 // pred_check_branch
        %194 = sbr.rel (%p192) target = $region20
      $region19: #{_stem_pool.2} parent=11 // pred_region
        %p195 = scmp.lt.s32.totalorder %s21, 0
        %s196 = scalar_select %p195, %s21, 0
        %s197 = scalar_lea.vmem %s2, %s196
      $region20: #{_stem_pool.2} parent=11 // pred_fallthru
        _
      // Predicated region
      $region21: #{_stem_pool.2} parent=11 // pred_check
        %p198 = pneg %p137
      $region22: #{_stem_pool.2} parent=11 // pred_check_branch
        %200 = sbr.rel (%p198) target = $region24
      $region23: #{_stem_pool.2} parent=11 // pred_region
        %p201 = scmp.lt.s32.totalorder %s21, 0
        %s202 = scalar_select %p201, %s21, 0
        %s203 = scalar_lea.vmem %s3, %s202
      $region24: #{_stem_pool.2} parent=11 // pred_fallthru
        _
    $region12: #{_stem_pool.2} parent=5 // pred_fallthru
      _
    %p204 = scmp.lt.s32.totalorder %s10, 8
    // Predicated region
    $region25: #{_stem_pool.2} parent=5 // pred_check
      %p205 = pneg %p204
    $region26: #{_stem_pool.2} parent=5 // pred_check_branch
      %207 = sbr.rel (%p205) target = $region28
    $region27: #{_stem_pool.2} parent=5 // pred_region
      // Predicated region
      $region29: #{_stem_pool.2} parent=27 // pred_check
        %p208 = pneg %p51
      $region30: #{_stem_pool.2} parent=27 // pred_check_branch
        %210 = sbr.rel (%p208) target = $region32
      $region31: #{_stem_pool.2} parent=27 // pred_region
        %s211 = smul.u32 32, %s17
        %s212 = smul.u32 2, %s19
        %p213 = scmp.lt.s32.totalorder %s211, 255
        %s214 = scalar_select %p213, %s211, 255
        %p215 = scmp.lt.s32.totalorder %s212, 1
        %s216 = scalar_select %p215, %s212, 1
        %s217 = smul.addr %s214, 2
        %s218 = sadd.s32 %s216, %s217
        %s219 = smul.addr %s218, 4
        %s220 = scalar_lea.vmem %s0, %s219
        %s221 = smul.u32 32, %s17
        %s222 = smul.u32 2, %s19
      $region32: #{_stem_pool.2} parent=27 // pred_fallthru
        _
    $region28: #{_stem_pool.2} parent=5 // pred_fallthru
      _
    %p223 = scmp.le.s32.totalorder 1, %s10
    %p224 = scmp.lt.s32.totalorder %s10, 9
    %p225 = pnand %p223, %p224
    %p226 = pneg %p225
    // Predicated region
    $region33: #{_stem_pool.2} parent=5 // pred_check
      _
    $region34: #{_stem_pool.2} parent=5 // pred_check_branch
      %228 = sbr.rel (%p225) target = $region36
    $region35: #{_stem_pool.2} parent=5 // pred_region
      %s229 = ssub.s32 %s10, 1
      %s230 = smul.u32 32, %s20
      %s231 = smul.u32 2, %s22
      %p232 = scmp.lt.s32.totalorder %s230, 255
      %s233 = scalar_select %p232, %s230, 255
      %p234 = scmp.lt.s32.totalorder %s231, 1
      %s235 = scalar_select %p234, %s231, 1
      %s236 = smul.addr %s233, 2
      %s237 = sadd.s32 %s235, %s236
      %s238 = smul.addr %s237, 4
      %s239 = scalar_lea.vmem %s0, %s238
      %p240 = pneg %p57
      %p241 = pneg %p54
      %s242 = smul.u32 32, %s22
      %p243 = scmp.lt.s32.totalorder %s242, 31
      %s244 = scalar_select %p243, %s242, 31
      %p245 = scmp.lt.s32.totalorder %s21, 0
      %s246 = scalar_select %p245, %s21, 0
      %s247 = sadd.s32 %s246, %s244
      %s248 = smul.addr %s247, 4
      %s249 = scalar_lea.vmem %s1, %s248
      %p250 = pneg %p85
      %p251 = pneg %p82
      %p252 = scmp.lt.s32.totalorder %s21, 0
      %s253 = scalar_select %p252, %s21, 0
      %s254 = scalar_lea.vmem %s2, %s253
      %p255 = pneg %p111
      %p256 = pneg %p108
      %p257 = scmp.lt.s32.totalorder %s21, 0
      %s258 = scalar_select %p257, %s21, 0
      %s259 = scalar_lea.vmem %s3, %s258
      %p260 = pneg %p137
      %p261 = pneg %p134
      %p262 = pneg %p165
      %p263 = pneg %p162
      %s264 = smul.u32 32, %s20
      %p265 = scmp.lt.s32.totalorder %s264, 255
      %s266 = scalar_select %p265, %s264, 255
      %p267 = scmp.lt.s32.totalorder %s21, 0
      %s268 = scalar_select %p267, %s21, 0
      %s269 = sadd.s32 %s268, %s266
      %s270 = smul.addr %s269, 4
      %s271 = scalar_lea.vmem %s4, %s270
      %s272 = smul.u32 32, %s20
      %s273 = smul.u32 2, %s22
      %p274 = scmp.lt.s32.totalorder %s272, 255
      %s275 = scalar_select %p274, %s272, 255
      %p276 = scmp.lt.s32.totalorder %s273, 1
      %s277 = scalar_select %p276, %s273, 1
      %s278 = smul.addr %s275, 2
      %s279 = sadd.s32 %s277, %s278
      %s280 = smul.addr %s279, 4
      %s281 = scalar_lea.vmem %s0, %s280
      %s282 = smul.u32 32, %s20
      %s283 = smul.u32 2, %s22
      %s284 = smul.u32 32, %s22
      %p285 = scmp.lt.s32.totalorder %s284, 31
      %s286 = scalar_select %p285, %s284, 31
      %p287 = scmp.lt.s32.totalorder %s21, 0
      %s288 = scalar_select %p287, %s21, 0
      %s289 = sadd.s32 %s288, %s286
      %s290 = smul.addr %s289, 4
      %s291 = scalar_lea.vmem %s1, %s290
      %s292 = smul.u32 32, %s22
      %p293 = scmp.lt.s32.totalorder %s21, 0
      %s294 = scalar_select %p293, %s21, 0
      %s295 = scalar_lea.vmem %s2, %s294
      %p296 = scmp.lt.s32.totalorder %s21, 0
      %s297 = scalar_select %p296, %s21, 0
      %s298 = scalar_lea.vmem %s3, %s297
      %s299 = smul.u32 32, %s20
      %p300 = scmp.lt.s32.totalorder %s299, 255
      %s301 = scalar_select %p300, %s299, 255
      %p302 = scmp.lt.s32.totalorder %s21, 0
      %s303 = scalar_select %p302, %s21, 0
      %s304 = sadd.s32 %s303, %s301
      %s305 = smul.addr %s304, 4
      %s306 = scalar_lea.vmem %s4, %s305
      %s307 = smul.u32 32, %s20
      %p309 = scmp.eq.s32.totalorder %s22, 0
      // Predicated region
      $region37: #{_stem_pool.2} parent=35 // pred_check
        %p310 = pneg %p309
      $region38: #{_stem_pool.2} parent=35 // pred_check_branch
        %312 = sbr.rel (%p310) target = $region40
      $region39: #{_stem_pool.2} parent=35 // pred_region
        %313 = vst [vmem:[#allocation2] sm:$0xff] 0.0
        %314 = vst [vmem:[#allocation2 + $0x8] sm:$0xff] 0.0
        %315 = vst [vmem:[#allocation2 + $0x10] sm:$0xff] 0.0
        %316 = vst [vmem:[#allocation2 + $0x18] sm:$0xff] 0.0
        %317 = vst [vmem:[#allocation2 + $0x20] sm:$0xff] 0.0
        %318 = vst [vmem:[#allocation2 + $0x28] sm:$0xff] 0.0
        %319 = vst [vmem:[#allocation2 + $0x30] sm:$0xff] 0.0
        %320 = vst [vmem:[#allocation2 + $0x38] sm:$0xff] 0.0
        %321 = vst [vmem:[#allocation2 + $0x40] sm:$0xff] 0.0
        %322 = vst [vmem:[#allocation2 + $0x48] sm:$0xff] 0.0
        %323 = vst [vmem:[#allocation2 + $0x50] sm:$0xff] 0.0
        %324 = vst [vmem:[#allocation2 + $0x58] sm:$0xff] 0.0
        %325 = vst [vmem:[#allocation2 + $0x60] sm:$0xff] 0.0
        %326 = vst [vmem:[#allocation2 + $0x68] sm:$0xff] 0.0
        %327 = vst [vmem:[#allocation2 + $0x70] sm:$0xff] 0.0
        %328 = vst [vmem:[#allocation2 + $0x78] sm:$0xff] 0.0
        %329 = vst [vmem:[#allocation2 + $0x80] sm:$0xff] 0.0
        %330 = vst [vmem:[#allocation2 + $0x88] sm:$0xff] 0.0
        %331 = vst [vmem:[#allocation2 + $0x90] sm:$0xff] 0.0
        %332 = vst [vmem:[#allocation2 + $0x98] sm:$0xff] 0.0
        %333 = vst [vmem:[#allocation2 + $0xa0] sm:$0xff] 0.0
        %334 = vst [vmem:[#allocation2 + $0xa8] sm:$0xff] 0.0
        %335 = vst [vmem:[#allocation2 + $0xb0] sm:$0xff] 0.0
        %336 = vst [vmem:[#allocation2 + $0xb8] sm:$0xff] 0.0
        %337 = vst [vmem:[#allocation2 + $0xc0] sm:$0xff] 0.0
        %338 = vst [vmem:[#allocation2 + $0xc8] sm:$0xff] 0.0
        %339 = vst [vmem:[#allocation2 + $0xd0] sm:$0xff] 0.0
        %340 = vst [vmem:[#allocation2 + $0xd8] sm:$0xff] 0.0
        %341 = vst [vmem:[#allocation2 + $0xe0] sm:$0xff] 0.0
        %342 = vst [vmem:[#allocation2 + $0xe8] sm:$0xff] 0.0
        %343 = vst [vmem:[#allocation2 + $0xf0] sm:$0xff] 0.0
        %344 = vst [vmem:[#allocation2 + $0xf8] sm:$0xff] 0.0
      $region40: #{_stem_pool.2} parent=35 // pred_fallthru
        _
      %v345 = vld [vmem:[#allocation2] sm:$0xff]
      %v346 = vld [vmem:[#allocation2 + $0x8] sm:$0xff]
      %v347 = vld [vmem:[#allocation2 + $0x10] sm:$0xff]
      %v348 = vld [vmem:[#allocation2 + $0x18] sm:$0xff]
      %v349 = vld [vmem:[#allocation2 + $0x20] sm:$0xff]
      %v350 = vld [vmem:[#allocation2 + $0x28] sm:$0xff]
      %v351 = vld [vmem:[#allocation2 + $0x30] sm:$0xff]
      %v352 = vld [vmem:[#allocation2 + $0x38] sm:$0xff]
      %v353 = vld [vmem:[#allocation2 + $0x40] sm:$0xff]
      %v354 = vld [vmem:[#allocation2 + $0x48] sm:$0xff]
      %v355 = vld [vmem:[#allocation2 + $0x50] sm:$0xff]
      %v356 = vld [vmem:[#allocation2 + $0x58] sm:$0xff]
      %v357 = vld [vmem:[#allocation2 + $0x60] sm:$0xff]
      %v358 = vld [vmem:[#allocation2 + $0x68] sm:$0xff]
      %v359 = vld [vmem:[#allocation2 + $0x70] sm:$0xff]
      %v360 = vld [vmem:[#allocation2 + $0x78] sm:$0xff]
      %v361 = vld [vmem:[#allocation2 + $0x80] sm:$0xff]
      %v362 = vld [vmem:[#allocation2 + $0x88] sm:$0xff]
      %v363 = vld [vmem:[#allocation2 + $0x90] sm:$0xff]
      %v364 = vld [vmem:[#allocation2 + $0x98] sm:$0xff]
      %v365 = vld [vmem:[#allocation2 + $0xa0] sm:$0xff]
      %v366 = vld [vmem:[#allocation2 + $0xa8] sm:$0xff]
      %v367 = vld [vmem:[#allocation2 + $0xb0] sm:$0xff]
      %v368 = vld [vmem:[#allocation2 + $0xb8] sm:$0xff]
      %v369 = vld [vmem:[#allocation2 + $0xc0] sm:$0xff]
      %v370 = vld [vmem:[#allocation2 + $0xc8] sm:$0xff]
      %v371 = vld [vmem:[#allocation2 + $0xd0] sm:$0xff]
      %v372 = vld [vmem:[#allocation2 + $0xd8] sm:$0xff]
      %v373 = vld [vmem:[#allocation2 + $0xe0] sm:$0xff]
      %v374 = vld [vmem:[#allocation2 + $0xe8] sm:$0xff]
      %v375 = vld [vmem:[#allocation2 + $0xf0] sm:$0xff]
      %v376 = vld [vmem:[#allocation2 + $0xf8] sm:$0xff]
      %v377 = vld [vmem:[%s281] sm:$0xff]
      %v378 = vld [vmem:[%s281 + $0x8] sm:$0xff]
      %v379 = vld [vmem:[%s281 + $0x10] sm:$0xff]
      %v380 = vld [vmem:[%s281 + $0x18] sm:$0xff]
      %v381 = vld [vmem:[%s281 + $0x20] sm:$0xff]
      %v382 = vld [vmem:[%s281 + $0x28] sm:$0xff]
      %v383 = vld [vmem:[%s281 + $0x30] sm:$0xff]
      %v384 = vld [vmem:[%s281 + $0x38] sm:$0xff]
      %v385 = vld [vmem:[%s281 + $0x40] sm:$0xff]
      %v386 = vld [vmem:[%s281 + $0x48] sm:$0xff]
      %v387 = vld [vmem:[%s281 + $0x50] sm:$0xff]
      %v388 = vld [vmem:[%s281 + $0x58] sm:$0xff]
      %v389 = vld [vmem:[%s281 + $0x60] sm:$0xff]
      %v390 = vld [vmem:[%s281 + $0x68] sm:$0xff]
      %v391 = vld [vmem:[%s281 + $0x70] sm:$0xff]
      %v392 = vld [vmem:[%s281 + $0x78] sm:$0xff]
      %v393 = vld [vmem:[%s281 + $0x80] sm:$0xff]
      %v394 = vld [vmem:[%s281 + $0x88] sm:$0xff]
      %v395 = vld [vmem:[%s281 + $0x90] sm:$0xff]
      %v396 = vld [vmem:[%s281 + $0x98] sm:$0xff]
      %v397 = vld [vmem:[%s281 + $0xa0] sm:$0xff]
      %v398 = vld [vmem:[%s281 + $0xa8] sm:$0xff]
      %v399 = vld [vmem:[%s281 + $0xb0] sm:$0xff]
      %v400 = vld [vmem:[%s281 + $0xb8] sm:$0xff]
      %v401 = vld [vmem:[%s281 + $0xc0] sm:$0xff]
      %v402 = vld [vmem:[%s281 + $0xc8] sm:$0xff]
      %v403 = vld [vmem:[%s281 + $0xd0] sm:$0xff]
      %v404 = vld [vmem:[%s281 + $0xd8] sm:$0xff]
      %v405 = vld [vmem:[%s281 + $0xe0] sm:$0xff]
      %v406 = vld [vmem:[%s281 + $0xe8] sm:$0xff]
      %v407 = vld [vmem:[%s281 + $0xf0] sm:$0xff]
      %v408 = vld [vmem:[%s281 + $0xf8] sm:$0xff]
      %v409 = vld [vmem:[%s291] sm:$0xf]
      %v410 = vld [vmem:[%s291 + $0x4] sm:$0xf]
      %v411 = vld [vmem:[%s291 + $0x8] sm:$0xf]
      %v412 = vld [vmem:[%s291 + $0xc] sm:$0xf]
      %v413 = vld [vmem:[%s291 + $0x10] sm:$0xf]
      %v414 = vld [vmem:[%s291 + $0x14] sm:$0xf]
      %v415 = vld [vmem:[%s291 + $0x18] sm:$0xf]
      %v416 = vld [vmem:[%s291 + $0x1c] sm:$0xf]
      %v417 = vld [vmem:[%s291 + $0x20] sm:$0xf]
      %v418 = vld [vmem:[%s291 + $0x24] sm:$0xf]
      %v419 = vld [vmem:[%s291 + $0x28] sm:$0xf]
      %v420 = vld [vmem:[%s291 + $0x2c] sm:$0xf]
      %v421 = vld [vmem:[%s291 + $0x30] sm:$0xf]
      %v422 = vld [vmem:[%s291 + $0x34] sm:$0xf]
      %v423 = vld [vmem:[%s291 + $0x38] sm:$0xf]
      %v424 = vld [vmem:[%s291 + $0x3c] sm:$0xf]
      %v425 = vld [vmem:[%s291 + $0x40] sm:$0xf]
      %v426 = vld [vmem:[%s291 + $0x44] sm:$0xf]
      %v427 = vld [vmem:[%s291 + $0x48] sm:$0xf]
      %v428 = vld [vmem:[%s291 + $0x4c] sm:$0xf]
      %v429 = vld [vmem:[%s291 + $0x50] sm:$0xf]
      %v430 = vld [vmem:[%s291 + $0x54] sm:$0xf]
      %v431 = vld [vmem:[%s291 + $0x58] sm:$0xf]
      %v432 = vld [vmem:[%s291 + $0x5c] sm:$0xf]
      %v433 = vld [vmem:[%s291 + $0x60] sm:$0xf]
      %v434 = vld [vmem:[%s291 + $0x64] sm:$0xf]
      %v435 = vld [vmem:[%s291 + $0x68] sm:$0xf]
      %v436 = vld [vmem:[%s291 + $0x6c] sm:$0xf]
      %v437 = vld [vmem:[%s291 + $0x70] sm:$0xf]
      %v438 = vld [vmem:[%s291 + $0x74] sm:$0xf]
      %v439 = vld [vmem:[%s291 + $0x78] sm:$0xf]
      %v440 = vld [vmem:[%s291 + $0x7c] sm:$0xf]
      %v473 = vunpack.c.l.b16 %v377
      %v474 = vunpack.c.h.b16 %v377
      %v475 = vunpack.c.l.b16 %v378
      %v476 = vunpack.c.h.b16 %v378
      %v477 = vunpack.c.l.b16 %v379
      %v478 = vunpack.c.h.b16 %v379
      %v479 = vunpack.c.l.b16 %v380
      %v480 = vunpack.c.h.b16 %v380
      %v481 = vunpack.c.l.b16 %v381
      %v482 = vunpack.c.h.b16 %v381
      %v483 = vunpack.c.l.b16 %v382
      %v484 = vunpack.c.h.b16 %v382
      %v485 = vunpack.c.l.b16 %v383
      %v486 = vunpack.c.h.b16 %v383
      %v487 = vunpack.c.l.b16 %v384
      %v488 = vunpack.c.h.b16 %v384
      %v489 = vunpack.c.l.b16 %v385
      %v490 = vunpack.c.h.b16 %v385
      %v491 = vunpack.c.l.b16 %v386
      %v492 = vunpack.c.h.b16 %v386
      %v493 = vunpack.c.l.b16 %v387
      %v494 = vunpack.c.h.b16 %v387
      %v495 = vunpack.c.l.b16 %v388
      %v496 = vunpack.c.h.b16 %v388
      %v497 = vunpack.c.l.b16 %v389
      %v498 = vunpack.c.h.b16 %v389
      %v499 = vunpack.c.l.b16 %v390
      %v500 = vunpack.c.h.b16 %v390
      %v501 = vunpack.c.l.b16 %v391
      %v502 = vunpack.c.h.b16 %v391
      %v503 = vunpack.c.l.b16 %v392
      %v504 = vunpack.c.h.b16 %v392
      %v505 = vunpack.c.l.b16 %v393
      %v506 = vunpack.c.h.b16 %v393
      %v507 = vunpack.c.l.b16 %v394
      %v508 = vunpack.c.h.b16 %v394
      %v509 = vunpack.c.l.b16 %v395
      %v510 = vunpack.c.h.b16 %v395
      %v511 = vunpack.c.l.b16 %v396
      %v512 = vunpack.c.h.b16 %v396
      %v513 = vunpack.c.l.b16 %v397
      %v514 = vunpack.c.h.b16 %v397
      %v515 = vunpack.c.l.b16 %v398
      %v516 = vunpack.c.h.b16 %v398
      %v517 = vunpack.c.l.b16 %v399
      %v518 = vunpack.c.h.b16 %v399
      %v519 = vunpack.c.l.b16 %v400
      %v520 = vunpack.c.h.b16 %v400
      %v521 = vunpack.c.l.b16 %v401
      %v522 = vunpack.c.h.b16 %v401
      %v523 = vunpack.c.l.b16 %v402
      %v524 = vunpack.c.h.b16 %v402
      %v525 = vunpack.c.l.b16 %v403
      %v526 = vunpack.c.h.b16 %v403
      %v527 = vunpack.c.l.b16 %v404
      %v528 = vunpack.c.h.b16 %v404
      %v529 = vunpack.c.l.b16 %v405
      %v530 = vunpack.c.h.b16 %v405
      %v531 = vunpack.c.l.b16 %v406
      %v532 = vunpack.c.h.b16 %v406
      %v533 = vunpack.c.l.b16 %v407
      %v534 = vunpack.c.h.b16 %v407
      %v535 = vunpack.c.l.b16 %v408
      %v536 = vunpack.c.h.b16 %v408
      %v537 = vpack.c.b16 %v475, %v473
      %v538 = vpack.c.b16 %v476, %v474
      %v539 = vpack.c.b16 %v479, %v477
      %v540 = vpack.c.b16 %v480, %v478
      %v541 = vpack.c.b16 %v483, %v481
      %v542 = vpack.c.b16 %v484, %v482
      %v543 = vpack.c.b16 %v487, %v485
      %v544 = vpack.c.b16 %v488, %v486
      %v545 = vpack.c.b16 %v491, %v489
      %v546 = vpack.c.b16 %v492, %v490
      %v547 = vpack.c.b16 %v495, %v493
      %v548 = vpack.c.b16 %v496, %v494
      %v549 = vpack.c.b16 %v499, %v497
      %v550 = vpack.c.b16 %v500, %v498
      %v551 = vpack.c.b16 %v503, %v501
      %v552 = vpack.c.b16 %v504, %v502
      %v553 = vpack.c.b16 %v507, %v505
      %v554 = vpack.c.b16 %v508, %v506
      %v555 = vpack.c.b16 %v511, %v509
      %v556 = vpack.c.b16 %v512, %v510
      %v557 = vpack.c.b16 %v515, %v513
      %v558 = vpack.c.b16 %v516, %v514
      %v559 = vpack.c.b16 %v519, %v517
      %v560 = vpack.c.b16 %v520, %v518
      %v561 = vpack.c.b16 %v523, %v521
      %v562 = vpack.c.b16 %v524, %v522
      %v563 = vpack.c.b16 %v527, %v525
      %v564 = vpack.c.b16 %v528, %v526
      %v565 = vpack.c.b16 %v531, %v529
      %v566 = vpack.c.b16 %v532, %v530
      %v567 = vpack.c.b16 %v535, %v533
      %v568 = vpack.c.b16 %v536, %v534
      %v633 = vunpack.c.l.b16 %v409
      %v634 = vunpack.c.l.b16 %v410
      %v635 = vunpack.c.l.b16 %v411
      %v636 = vunpack.c.l.b16 %v412
      %v637 = vunpack.c.l.b16 %v413
      %v638 = vunpack.c.l.b16 %v414
      %v639 = vunpack.c.l.b16 %v415
      %v640 = vunpack.c.l.b16 %v416
      %v641 = vunpack.c.l.b16 %v417
      %v642 = vunpack.c.l.b16 %v418
      %v643 = vunpack.c.l.b16 %v419
      %v644 = vunpack.c.l.b16 %v420
      %v645 = vunpack.c.l.b16 %v421
      %v646 = vunpack.c.l.b16 %v422
      %v647 = vunpack.c.l.b16 %v423
      %v648 = vunpack.c.l.b16 %v424
      %v649 = vunpack.c.l.b16 %v425
      %v650 = vunpack.c.l.b16 %v426
      %v651 = vunpack.c.l.b16 %v427
      %v652 = vunpack.c.l.b16 %v428
      %v653 = vunpack.c.l.b16 %v429
      %v654 = vunpack.c.l.b16 %v430
      %v655 = vunpack.c.l.b16 %v431
      %v656 = vunpack.c.l.b16 %v432
      %v657 = vunpack.c.l.b16 %v433
      %v658 = vunpack.c.l.b16 %v434
      %v659 = vunpack.c.l.b16 %v435
      %v660 = vunpack.c.l.b16 %v436
      %v661 = vunpack.c.l.b16 %v437
      %v662 = vunpack.c.l.b16 %v438
      %v663 = vunpack.c.l.b16 %v439
      %v664 = vunpack.c.l.b16 %v440
      %v665 = vpack.c.b16 %v634, %v633
      %v666 = vpack.c.b16 %v636, %v635
      %v667 = vpack.c.b16 %v638, %v637
      %v668 = vpack.c.b16 %v640, %v639
      %v669 = vpack.c.b16 %v642, %v641
      %v670 = vpack.c.b16 %v644, %v643
      %v671 = vpack.c.b16 %v646, %v645
      %v672 = vpack.c.b16 %v648, %v647
      %v673 = vpack.c.b16 %v650, %v649
      %v674 = vpack.c.b16 %v652, %v651
      %v675 = vpack.c.b16 %v654, %v653
      %v676 = vpack.c.b16 %v656, %v655
      %v677 = vpack.c.b16 %v658, %v657
      %v678 = vpack.c.b16 %v660, %v659
      %v679 = vpack.c.b16 %v662, %v661
      %v680 = vpack.c.b16 %v664, %v663
      %697 = vmatprep.subr.bf16.mxu0 0
      %698 = vmatpush1.bf16.msra.mxu0 %v672
      %699 = vmatprep.subr.bf16.mxu0 0
      %700 = vmatpush1.bf16.msra.mxu0 %v671
      %701 = vmatprep.subr.bf16.mxu0 0
      %702 = vmatpush1.bf16.msra.mxu0 %v670
      %703 = vmatprep.subr.bf16.mxu0 0
      %704 = vmatpush1.bf16.msra.mxu0 %v669
      %705 = vmatprep.subr.bf16.mxu0 0
      %706 = vmatpush1.bf16.msra.mxu0 %v668
      %707 = vmatprep.subr.bf16.mxu0 0
      %708 = vmatpush1.bf16.msra.mxu0 %v667
      %709 = vmatprep.subr.bf16.mxu0 0
      %710 = vmatpush1.bf16.msra.mxu0 %v666
      %711 = vmatprep.subr.bf16.mxu0 0
      %712 = vmatpush1.bf16.msra.mxu0 %v665
      %713 = vmatprep.subr.bf16.mxu0 0
      %714 = vmatpush2.bf16.msra.mxu0 %v680
      %715 = vmatprep.subr.bf16.mxu0 0
      %716 = vmatpush2.bf16.msra.mxu0 %v679
      %717 = vmatprep.subr.bf16.mxu0 0
      %718 = vmatpush2.bf16.msra.mxu0 %v678
      %719 = vmatprep.subr.bf16.mxu0 0
      %720 = vmatpush2.bf16.msra.mxu0 %v677
      %721 = vmatprep.subr.bf16.mxu0 0
      %722 = vmatpush2.bf16.msra.mxu0 %v676
      %723 = vmatprep.subr.bf16.mxu0 0
      %724 = vmatpush2.bf16.msra.mxu0 %v675
      %725 = vmatprep.subr.bf16.mxu0 0
      %726 = vmatpush2.bf16.msra.mxu0 %v674
      %727 = vmatprep.subr.bf16.mxu0 0
      %728 = vmatpush2.bf16.msra.mxu0 %v673
      %729 = vmatprep.mubr.bf16.mxu0 %v538
      %730 = vmatmul.mubr.bf16.gmra.mxu0 %v537
      %v731 = vpop.f32.mrf.mxu0
      %v732 = vadd.f32 0.0, %v731
      %v733 = vpop.f32.mrf.mxu0
      %v734 = vpop.f32.mrf.mxu0
      %v735 = vadd.f32 0.0, %v734
      %v736 = vpop.f32.mrf.mxu0
      %737 = vmatprep.mubr.bf16.mxu0 %v540
      %738 = vmatmul.mubr.bf16.gmra.mxu0 %v539
      %v739 = vpop.f32.mrf.mxu0
      %v740 = vadd.f32 0.0, %v739
      %v741 = vpop.f32.mrf.mxu0
      %v742 = vpop.f32.mrf.mxu0
      %v743 = vadd.f32 0.0, %v742
      %v744 = vpop.f32.mrf.mxu0
      %745 = vmatprep.mubr.bf16.mxu0 %v542
      %746 = vmatmul.mubr.bf16.gmra.mxu0 %v541
      %v747 = vpop.f32.mrf.mxu0
      %v748 = vadd.f32 0.0, %v747
      %v749 = vpop.f32.mrf.mxu0
      %v750 = vpop.f32.mrf.mxu0
      %v751 = vadd.f32 0.0, %v750
      %v752 = vpop.f32.mrf.mxu0
      %753 = vmatprep.mubr.bf16.mxu0 %v544
      %754 = vmatmul.mubr.bf16.gmra.mxu0 %v543
      %v755 = vpop.f32.mrf.mxu0
      %v756 = vadd.f32 0.0, %v755
      %v757 = vpop.f32.mrf.mxu0
      %v758 = vpop.f32.mrf.mxu0
      %v759 = vadd.f32 0.0, %v758
      %v760 = vpop.f32.mrf.mxu0
      %761 = vmatprep.mubr.bf16.mxu0 %v546
      %762 = vmatmul.mubr.bf16.gmra.mxu0 %v545
      %v763 = vpop.f32.mrf.mxu0
      %v764 = vadd.f32 0.0, %v763
      %v765 = vpop.f32.mrf.mxu0
      %v766 = vpop.f32.mrf.mxu0
      %v767 = vadd.f32 0.0, %v766
      %v768 = vpop.f32.mrf.mxu0
      %769 = vmatprep.mubr.bf16.mxu0 %v548
      %770 = vmatmul.mubr.bf16.gmra.mxu0 %v547
      %v771 = vpop.f32.mrf.mxu0
      %v772 = vadd.f32 0.0, %v771
      %v773 = vpop.f32.mrf.mxu0
      %v774 = vpop.f32.mrf.mxu0
      %v775 = vadd.f32 0.0, %v774
      %v776 = vpop.f32.mrf.mxu0
      %777 = vmatprep.mubr.bf16.mxu0 %v550
      %778 = vmatmul.mubr.bf16.gmra.mxu0 %v549
      %v779 = vpop.f32.mrf.mxu0
      %v780 = vadd.f32 0.0, %v779
      %v781 = vpop.f32.mrf.mxu0
      %v782 = vpop.f32.mrf.mxu0
      %v783 = vadd.f32 0.0, %v782
      %v784 = vpop.f32.mrf.mxu0
      %785 = vmatprep.mubr.bf16.mxu0 %v552
      %786 = vmatmul.mubr.bf16.gmra.mxu0 %v551
      %v787 = vpop.f32.mrf.mxu0
      %v788 = vadd.f32 0.0, %v787
      %v789 = vpop.f32.mrf.mxu0
      %v790 = vpop.f32.mrf.mxu0
      %v791 = vadd.f32 0.0, %v790
      %v792 = vpop.f32.mrf.mxu0
      %793 = vmatprep.mubr.bf16.mxu0 %v554
      %794 = vmatmul.mubr.bf16.gmra.mxu0 %v553
      %v795 = vpop.f32.mrf.mxu0
      %v796 = vadd.f32 0.0, %v795
      %v797 = vpop.f32.mrf.mxu0
      %v798 = vpop.f32.mrf.mxu0
      %v799 = vadd.f32 0.0, %v798
      %v800 = vpop.f32.mrf.mxu0
      %801 = vmatprep.mubr.bf16.mxu0 %v556
      %802 = vmatmul.mubr.bf16.gmra.mxu0 %v555
      %v803 = vpop.f32.mrf.mxu0
      %v804 = vadd.f32 0.0, %v803
      %v805 = vpop.f32.mrf.mxu0
      %v806 = vpop.f32.mrf.mxu0
      %v807 = vadd.f32 0.0, %v806
      %v808 = vpop.f32.mrf.mxu0
      %809 = vmatprep.mubr.bf16.mxu0 %v558
      %810 = vmatmul.mubr.bf16.gmra.mxu0 %v557
      %v811 = vpop.f32.mrf.mxu0
      %v812 = vadd.f32 0.0, %v811
      %v813 = vpop.f32.mrf.mxu0
      %v814 = vpop.f32.mrf.mxu0
      %v815 = vadd.f32 0.0, %v814
      %v816 = vpop.f32.mrf.mxu0
      %817 = vmatprep.mubr.bf16.mxu0 %v560
      %818 = vmatmul.mubr.bf16.gmra.mxu0 %v559
      %v819 = vpop.f32.mrf.mxu0
      %v820 = vadd.f32 0.0, %v819
      %v821 = vpop.f32.mrf.mxu0
      %v822 = vpop.f32.mrf.mxu0
      %v823 = vadd.f32 0.0, %v822
      %v824 = vpop.f32.mrf.mxu0
      %825 = vmatprep.mubr.bf16.mxu0 %v562
      %826 = vmatmul.mubr.bf16.gmra.mxu0 %v561
      %v827 = vpop.f32.mrf.mxu0
      %v828 = vadd.f32 0.0, %v827
      %v829 = vpop.f32.mrf.mxu0
      %v830 = vpop.f32.mrf.mxu0
      %v831 = vadd.f32 0.0, %v830
      %v832 = vpop.f32.mrf.mxu0
      %833 = vmatprep.mubr.bf16.mxu0 %v564
      %834 = vmatmul.mubr.bf16.gmra.mxu0 %v563
      %v835 = vpop.f32.mrf.mxu0
      %v836 = vadd.f32 0.0, %v835
      %v837 = vpop.f32.mrf.mxu0
      %v838 = vpop.f32.mrf.mxu0
      %v839 = vadd.f32 0.0, %v838
      %v840 = vpop.f32.mrf.mxu0
      %841 = vmatprep.mubr.bf16.mxu0 %v566
      %842 = vmatmul.mubr.bf16.gmra.mxu0 %v565
      %v843 = vpop.f32.mrf.mxu0
      %v844 = vadd.f32 0.0, %v843
      %v845 = vpop.f32.mrf.mxu0
      %v846 = vpop.f32.mrf.mxu0
      %v847 = vadd.f32 0.0, %v846
      %v848 = vpop.f32.mrf.mxu0
      %849 = vmatprep.mubr.bf16.mxu0 %v568
      %850 = vmatmul.mubr.bf16.gmra.mxu0 %v567
      %v851 = vpop.f32.mrf.mxu0
      %v852 = vadd.f32 0.0, %v851
      %v853 = vpop.f32.mrf.mxu0
      %v854 = vpop.f32.mrf.mxu0
      %v855 = vadd.f32 0.0, %v854
      %v856 = vpop.f32.mrf.mxu0
      %857 = vdwg.mxu0
      %v858 = vadd.f32 %v345, %v732
      %v859 = vadd.f32 %v346, %v735
      %v860 = vadd.f32 %v347, %v740
      %v861 = vadd.f32 %v348, %v743
      %v862 = vadd.f32 %v349, %v748
      %v863 = vadd.f32 %v350, %v751
      %v864 = vadd.f32 %v351, %v756
      %v865 = vadd.f32 %v352, %v759
      %v866 = vadd.f32 %v353, %v764
      %v867 = vadd.f32 %v354, %v767
      %v868 = vadd.f32 %v355, %v772
      %v869 = vadd.f32 %v356, %v775
      %v870 = vadd.f32 %v357, %v780
      %v871 = vadd.f32 %v358, %v783
      %v872 = vadd.f32 %v359, %v788
      %v873 = vadd.f32 %v360, %v791
      %v874 = vadd.f32 %v361, %v796
      %v875 = vadd.f32 %v362, %v799
      %v876 = vadd.f32 %v363, %v804
      %v877 = vadd.f32 %v364, %v807
      %v878 = vadd.f32 %v365, %v812
      %v879 = vadd.f32 %v366, %v815
      %v880 = vadd.f32 %v367, %v820
      %v881 = vadd.f32 %v368, %v823
      %v882 = vadd.f32 %v369, %v828
      %v883 = vadd.f32 %v370, %v831
      %v884 = vadd.f32 %v371, %v836
      %v885 = vadd.f32 %v372, %v839
      %v886 = vadd.f32 %v373, %v844
      %v887 = vadd.f32 %v374, %v847
      %v888 = vadd.f32 %v375, %v852
      %v889 = vadd.f32 %v376, %v855
      %890 = vst [vmem:[#allocation2] sm:$0xff] %v858
      %891 = vst [vmem:[#allocation2 + $0x8] sm:$0xff] %v859
      %892 = vst [vmem:[#allocation2 + $0x10] sm:$0xff] %v860
      %893 = vst [vmem:[#allocation2 + $0x18] sm:$0xff] %v861
      %894 = vst [vmem:[#allocation2 + $0x20] sm:$0xff] %v862
      %895 = vst [vmem:[#allocation2 + $0x28] sm:$0xff] %v863
      %896 = vst [vmem:[#allocation2 + $0x30] sm:$0xff] %v864
      %897 = vst [vmem:[#allocation2 + $0x38] sm:$0xff] %v865
      %898 = vst [vmem:[#allocation2 + $0x40] sm:$0xff] %v866
      %899 = vst [vmem:[#allocation2 + $0x48] sm:$0xff] %v867
      %900 = vst [vmem:[#allocation2 + $0x50] sm:$0xff] %v868
      %901 = vst [vmem:[#allocation2 + $0x58] sm:$0xff] %v869
      %902 = vst [vmem:[#allocation2 + $0x60] sm:$0xff] %v870
      %903 = vst [vmem:[#allocation2 + $0x68] sm:$0xff] %v871
      %904 = vst [vmem:[#allocation2 + $0x70] sm:$0xff] %v872
      %905 = vst [vmem:[#allocation2 + $0x78] sm:$0xff] %v873
      %906 = vst [vmem:[#allocation2 + $0x80] sm:$0xff] %v874
      %907 = vst [vmem:[#allocation2 + $0x88] sm:$0xff] %v875
      %908 = vst [vmem:[#allocation2 + $0x90] sm:$0xff] %v876
      %909 = vst [vmem:[#allocation2 + $0x98] sm:$0xff] %v877
      %910 = vst [vmem:[#allocation2 + $0xa0] sm:$0xff] %v878
      %911 = vst [vmem:[#allocation2 + $0xa8] sm:$0xff] %v879
      %912 = vst [vmem:[#allocation2 + $0xb0] sm:$0xff] %v880
      %913 = vst [vmem:[#allocation2 + $0xb8] sm:$0xff] %v881
      %914 = vst [vmem:[#allocation2 + $0xc0] sm:$0xff] %v882
      %915 = vst [vmem:[#allocation2 + $0xc8] sm:$0xff] %v883
      %916 = vst [vmem:[#allocation2 + $0xd0] sm:$0xff] %v884
      %917 = vst [vmem:[#allocation2 + $0xd8] sm:$0xff] %v885
      %918 = vst [vmem:[#allocation2 + $0xe0] sm:$0xff] %v886
      %919 = vst [vmem:[#allocation2 + $0xe8] sm:$0xff] %v887
      %920 = vst [vmem:[#allocation2 + $0xf0] sm:$0xff] %v888
      %921 = vst [vmem:[#allocation2 + $0xf8] sm:$0xff] %v889
      // Predicated region
      $region41: #{_stem_pool.2} parent=35 // pred_check
        %p922 = pneg %p309
      $region42: #{_stem_pool.2} parent=35 // pred_check_branch
        %924 = sbr.rel (%p922) target = $region44
      $region43: #{_stem_pool.2} parent=35 // pred_region
        %v925 = vld [vmem:[#allocation2] sm:$0xff]
        %v926 = vld [vmem:[#allocation2 + $0x8] sm:$0xff]
        %v927 = vld [vmem:[#allocation2 + $0x10] sm:$0xff]
        %v928 = vld [vmem:[#allocation2 + $0x18] sm:$0xff]
        %v929 = vld [vmem:[#allocation2 + $0x20] sm:$0xff]
        %v930 = vld [vmem:[#allocation2 + $0x28] sm:$0xff]
        %v931 = vld [vmem:[#allocation2 + $0x30] sm:$0xff]
        %v932 = vld [vmem:[#allocation2 + $0x38] sm:$0xff]
        %v933 = vld [vmem:[#allocation2 + $0x40] sm:$0xff]
        %v934 = vld [vmem:[#allocation2 + $0x48] sm:$0xff]
        %v935 = vld [vmem:[#allocation2 + $0x50] sm:$0xff]
        %v936 = vld [vmem:[#allocation2 + $0x58] sm:$0xff]
        %v937 = vld [vmem:[#allocation2 + $0x60] sm:$0xff]
        %v938 = vld [vmem:[#allocation2 + $0x68] sm:$0xff]
        %v939 = vld [vmem:[#allocation2 + $0x70] sm:$0xff]
        %v940 = vld [vmem:[#allocation2 + $0x78] sm:$0xff]
        %v941 = vld [vmem:[#allocation2 + $0x80] sm:$0xff]
        %v942 = vld [vmem:[#allocation2 + $0x88] sm:$0xff]
        %v943 = vld [vmem:[#allocation2 + $0x90] sm:$0xff]
        %v944 = vld [vmem:[#allocation2 + $0x98] sm:$0xff]
        %v945 = vld [vmem:[#allocation2 + $0xa0] sm:$0xff]
        %v946 = vld [vmem:[#allocation2 + $0xa8] sm:$0xff]
        %v947 = vld [vmem:[#allocation2 + $0xb0] sm:$0xff]
        %v948 = vld [vmem:[#allocation2 + $0xb8] sm:$0xff]
        %v949 = vld [vmem:[#allocation2 + $0xc0] sm:$0xff]
        %v950 = vld [vmem:[#allocation2 + $0xc8] sm:$0xff]
        %v951 = vld [vmem:[#allocation2 + $0xd0] sm:$0xff]
        %v952 = vld [vmem:[#allocation2 + $0xd8] sm:$0xff]
        %v953 = vld [vmem:[#allocation2 + $0xe0] sm:$0xff]
        %v954 = vld [vmem:[#allocation2 + $0xe8] sm:$0xff]
        %v955 = vld [vmem:[#allocation2 + $0xf0] sm:$0xff]
        %v956 = vld [vmem:[#allocation2 + $0xf8] sm:$0xff]
        %v957 = vld [vmem:[%s295] sm:$0x1]
        %v959 = vlaneseq
        %v960 = vshrl.u32 %v959, 7
        %v961 = vsub.s32 0, %v960
        %v962 = vrot.slane %v957, %v961
        %v964 = vmul.f32 %v925, %v962
        %v965 = vmul.f32 %v926, %v962
        %v966 = vmul.f32 %v927, %v962
        %v967 = vmul.f32 %v928, %v962
        %v968 = vmul.f32 %v929, %v962
        %v969 = vmul.f32 %v930, %v962
        %v970 = vmul.f32 %v931, %v962
        %v971 = vmul.f32 %v932, %v962
        %v972 = vmul.f32 %v933, %v962
        %v973 = vmul.f32 %v934, %v962
        %v974 = vmul.f32 %v935, %v962
        %v975 = vmul.f32 %v936, %v962
        %v976 = vmul.f32 %v937, %v962
        %v977 = vmul.f32 %v938, %v962
        %v978 = vmul.f32 %v939, %v962
        %v979 = vmul.f32 %v940, %v962
        %v980 = vmul.f32 %v941, %v962
        %v981 = vmul.f32 %v942, %v962
        %v982 = vmul.f32 %v943, %v962
        %v983 = vmul.f32 %v944, %v962
        %v984 = vmul.f32 %v945, %v962
        %v985 = vmul.f32 %v946, %v962
        %v986 = vmul.f32 %v947, %v962
        %v987 = vmul.f32 %v948, %v962
        %v988 = vmul.f32 %v949, %v962
        %v989 = vmul.f32 %v950, %v962
        %v990 = vmul.f32 %v951, %v962
        %v991 = vmul.f32 %v952, %v962
        %v992 = vmul.f32 %v953, %v962
        %v993 = vmul.f32 %v954, %v962
        %v994 = vmul.f32 %v955, %v962
        %v995 = vmul.f32 %v956, %v962
        %v996 = vld [vmem:[%s298] sm:$0x1]
        %v998 = vlaneseq
        %v999 = vshrl.u32 %v998, 7
        %v1000 = vsub.s32 0, %v999
        %v1001 = vrot.slane %v996, %v1000
        %v1003 = vadd.f32 %v964, %v1001
        %v1004 = vadd.f32 %v965, %v1001
        %v1005 = vadd.f32 %v966, %v1001
        %v1006 = vadd.f32 %v967, %v1001
        %v1007 = vadd.f32 %v968, %v1001
        %v1008 = vadd.f32 %v969, %v1001
        %v1009 = vadd.f32 %v970, %v1001
        %v1010 = vadd.f32 %v971, %v1001
        %v1011 = vadd.f32 %v972, %v1001
        %v1012 = vadd.f32 %v973, %v1001
        %v1013 = vadd.f32 %v974, %v1001
        %v1014 = vadd.f32 %v975, %v1001
        %v1015 = vadd.f32 %v976, %v1001
        %v1016 = vadd.f32 %v977, %v1001
        %v1017 = vadd.f32 %v978, %v1001
        %v1018 = vadd.f32 %v979, %v1001
        %v1019 = vadd.f32 %v980, %v1001
        %v1020 = vadd.f32 %v981, %v1001
        %v1021 = vadd.f32 %v982, %v1001
        %v1022 = vadd.f32 %v983, %v1001
        %v1023 = vadd.f32 %v984, %v1001
        %v1024 = vadd.f32 %v985, %v1001
        %v1025 = vadd.f32 %v986, %v1001
        %v1026 = vadd.f32 %v987, %v1001
        %v1027 = vadd.f32 %v988, %v1001
        %v1028 = vadd.f32 %v989, %v1001
        %v1029 = vadd.f32 %v990, %v1001
        %v1030 = vadd.f32 %v991, %v1001
        %v1031 = vadd.f32 %v992, %v1001
        %v1032 = vadd.f32 %v993, %v1001
        %v1033 = vadd.f32 %v994, %v1001
        %v1034 = vadd.f32 %v995, %v1001
        %v1035 = vmax.f32 %v1003, 0.0
        %v1036 = vmax.f32 %v1004, 0.0
        %v1037 = vmax.f32 %v1005, 0.0
        %v1038 = vmax.f32 %v1006, 0.0
        %v1039 = vmax.f32 %v1007, 0.0
        %v1040 = vmax.f32 %v1008, 0.0
        %v1041 = vmax.f32 %v1009, 0.0
        %v1042 = vmax.f32 %v1010, 0.0
        %v1043 = vmax.f32 %v1011, 0.0
        %v1044 = vmax.f32 %v1012, 0.0
        %v1045 = vmax.f32 %v1013, 0.0
        %v1046 = vmax.f32 %v1014, 0.0
        %v1047 = vmax.f32 %v1015, 0.0
        %v1048 = vmax.f32 %v1016, 0.0
        %v1049 = vmax.f32 %v1017, 0.0
        %v1050 = vmax.f32 %v1018, 0.0
        %v1051 = vmax.f32 %v1019, 0.0
        %v1052 = vmax.f32 %v1020, 0.0
        %v1053 = vmax.f32 %v1021, 0.0
        %v1054 = vmax.f32 %v1022, 0.0
        %v1055 = vmax.f32 %v1023, 0.0
        %v1056 = vmax.f32 %v1024, 0.0
        %v1057 = vmax.f32 %v1025, 0.0
        %v1058 = vmax.f32 %v1026, 0.0
        %v1059 = vmax.f32 %v1027, 0.0
        %v1060 = vmax.f32 %v1028, 0.0
        %v1061 = vmax.f32 %v1029, 0.0
        %v1062 = vmax.f32 %v1030, 0.0
        %v1063 = vmax.f32 %v1031, 0.0
        %v1064 = vmax.f32 %v1032, 0.0
        %v1065 = vmax.f32 %v1033, 0.0
        %v1066 = vmax.f32 %v1034, 0.0
        %v1067 = vpack.c.bf16 %v1036, %v1035
        %v1068 = vpack.c.bf16 %v1038, %v1037
        %v1069 = vpack.c.bf16 %v1040, %v1039
        %v1070 = vpack.c.bf16 %v1042, %v1041
        %v1071 = vpack.c.bf16 %v1044, %v1043
        %v1072 = vpack.c.bf16 %v1046, %v1045
        %v1073 = vpack.c.bf16 %v1048, %v1047
        %v1074 = vpack.c.bf16 %v1050, %v1049
        %v1075 = vpack.c.bf16 %v1052, %v1051
        %v1076 = vpack.c.bf16 %v1054, %v1053
        %v1077 = vpack.c.bf16 %v1056, %v1055
        %v1078 = vpack.c.bf16 %v1058, %v1057
        %v1079 = vpack.c.bf16 %v1060, %v1059
        %v1080 = vpack.c.bf16 %v1062, %v1061
        %v1081 = vpack.c.bf16 %v1064, %v1063
        %v1082 = vpack.c.bf16 %v1066, %v1065
        %v1099 = vunpack.c.l.b16 %v1067
        %v1100 = vunpack.c.h.b16 %v1067
        %v1101 = vunpack.c.l.b16 %v1068
        %v1102 = vunpack.c.h.b16 %v1068
        %v1103 = vunpack.c.l.b16 %v1069
        %v1104 = vunpack.c.h.b16 %v1069
        %v1105 = vunpack.c.l.b16 %v1070
        %v1106 = vunpack.c.h.b16 %v1070
        %v1107 = vunpack.c.l.b16 %v1071
        %v1108 = vunpack.c.h.b16 %v1071
        %v1109 = vunpack.c.l.b16 %v1072
        %v1110 = vunpack.c.h.b16 %v1072
        %v1111 = vunpack.c.l.b16 %v1073
        %v1112 = vunpack.c.h.b16 %v1073
        %v1113 = vunpack.c.l.b16 %v1074
        %v1114 = vunpack.c.h.b16 %v1074
        %v1115 = vunpack.c.l.b16 %v1075
        %v1116 = vunpack.c.h.b16 %v1075
        %v1117 = vunpack.c.l.b16 %v1076
        %v1118 = vunpack.c.h.b16 %v1076
        %v1119 = vunpack.c.l.b16 %v1077
        %v1120 = vunpack.c.h.b16 %v1077
        %v1121 = vunpack.c.l.b16 %v1078
        %v1122 = vunpack.c.h.b16 %v1078
        %v1123 = vunpack.c.l.b16 %v1079
        %v1124 = vunpack.c.h.b16 %v1079
        %v1125 = vunpack.c.l.b16 %v1080
        %v1126 = vunpack.c.h.b16 %v1080
        %v1127 = vunpack.c.l.b16 %v1081
        %v1128 = vunpack.c.h.b16 %v1081
        %v1129 = vunpack.c.l.b16 %v1082
        %v1130 = vunpack.c.h.b16 %v1082
        %v1131 = vpack.c.b16 %v1099, %v1099
        %v1132 = vpack.c.b16 %v1100, %v1100
        %v1133 = vpack.c.b16 %v1101, %v1101
        %v1134 = vpack.c.b16 %v1102, %v1102
        %v1135 = vpack.c.b16 %v1103, %v1103
        %v1136 = vpack.c.b16 %v1104, %v1104
        %v1137 = vpack.c.b16 %v1105, %v1105
        %v1138 = vpack.c.b16 %v1106, %v1106
        %v1139 = vpack.c.b16 %v1107, %v1107
        %v1140 = vpack.c.b16 %v1108, %v1108
        %v1141 = vpack.c.b16 %v1109, %v1109
        %v1142 = vpack.c.b16 %v1110, %v1110
        %v1143 = vpack.c.b16 %v1111, %v1111
        %v1144 = vpack.c.b16 %v1112, %v1112
        %v1145 = vpack.c.b16 %v1113, %v1113
        %v1146 = vpack.c.b16 %v1114, %v1114
        %v1147 = vpack.c.b16 %v1115, %v1115
        %v1148 = vpack.c.b16 %v1116, %v1116
        %v1149 = vpack.c.b16 %v1117, %v1117
        %v1150 = vpack.c.b16 %v1118, %v1118
        %v1151 = vpack.c.b16 %v1119, %v1119
        %v1152 = vpack.c.b16 %v1120, %v1120
        %v1153 = vpack.c.b16 %v1121, %v1121
        %v1154 = vpack.c.b16 %v1122, %v1122
        %v1155 = vpack.c.b16 %v1123, %v1123
        %v1156 = vpack.c.b16 %v1124, %v1124
        %v1157 = vpack.c.b16 %v1125, %v1125
        %v1158 = vpack.c.b16 %v1126, %v1126
        %v1159 = vpack.c.b16 %v1127, %v1127
        %v1160 = vpack.c.b16 %v1128, %v1128
        %v1161 = vpack.c.b16 %v1129, %v1129
        %v1162 = vpack.c.b16 %v1130, %v1130
        %1195 = vst [vmem:[%s306] sm:$0xf] %v1131
        %1196 = vst [vmem:[%s306 + $0x4] sm:$0xf] %v1132
        %1197 = vst [vmem:[%s306 + $0x8] sm:$0xf] %v1133
        %1198 = vst [vmem:[%s306 + $0xc] sm:$0xf] %v1134
        %1199 = vst [vmem:[%s306 + $0x10] sm:$0xf] %v1135
        %1200 = vst [vmem:[%s306 + $0x14] sm:$0xf] %v1136
        %1201 = vst [vmem:[%s306 + $0x18] sm:$0xf] %v1137
        %1202 = vst [vmem:[%s306 + $0x1c] sm:$0xf] %v1138
        %1203 = vst [vmem:[%s306 + $0x20] sm:$0xf] %v1139
        %1204 = vst [vmem:[%s306 + $0x24] sm:$0xf] %v1140
        %1205 = vst [vmem:[%s306 + $0x28] sm:$0xf] %v1141
        %1206 = vst [vmem:[%s306 + $0x2c] sm:$0xf] %v1142
        %1207 = vst [vmem:[%s306 + $0x30] sm:$0xf] %v1143
        %1208 = vst [vmem:[%s306 + $0x34] sm:$0xf] %v1144
        %1209 = vst [vmem:[%s306 + $0x38] sm:$0xf] %v1145
        %1210 = vst [vmem:[%s306 + $0x3c] sm:$0xf] %v1146
        %1211 = vst [vmem:[%s306 + $0x40] sm:$0xf] %v1147
        %1212 = vst [vmem:[%s306 + $0x44] sm:$0xf] %v1148
        %1213 = vst [vmem:[%s306 + $0x48] sm:$0xf] %v1149
        %1214 = vst [vmem:[%s306 + $0x4c] sm:$0xf] %v1150
        %1215 = vst [vmem:[%s306 + $0x50] sm:$0xf] %v1151
        %1216 = vst [vmem:[%s306 + $0x54] sm:$0xf] %v1152
        %1217 = vst [vmem:[%s306 + $0x58] sm:$0xf] %v1153
        %1218 = vst [vmem:[%s306 + $0x5c] sm:$0xf] %v1154
        %1219 = vst [vmem:[%s306 + $0x60] sm:$0xf] %v1155
        %1220 = vst [vmem:[%s306 + $0x64] sm:$0xf] %v1156
        %1221 = vst [vmem:[%s306 + $0x68] sm:$0xf] %v1157
        %1222 = vst [vmem:[%s306 + $0x6c] sm:$0xf] %v1158
        %1223 = vst [vmem:[%s306 + $0x70] sm:$0xf] %v1159
        %1224 = vst [vmem:[%s306 + $0x74] sm:$0xf] %v1160
        %1225 = vst [vmem:[%s306 + $0x78] sm:$0xf] %v1161
        %1226 = vst [vmem:[%s306 + $0x7c] sm:$0xf] %v1162
      $region44: #{_stem_pool.2} parent=35 // pred_fallthru
        _
      %s1227 = smul.u32 32, %s20
      %p1228 = scmp.lt.s32.totalorder %s1227, 255
      %s1229 = scalar_select %p1228, %s1227, 255
      %p1230 = scmp.lt.s32.totalorder %s21, 0
      %s1231 = scalar_select %p1230, %s21, 0
      %s1232 = sadd.s32 %s1231, %s1229
      %s1233 = smul.addr %s1232, 4
      %s1234 = scalar_lea.vmem %s4, %s1233
      // Predicated region
      $region45: #{_stem_pool.2} parent=35 // pred_check
        %p1235 = pneg %p162
      $region46: #{_stem_pool.2} parent=35 // pred_check_branch
        %1237 = sbr.rel (%p1235) target = $region48
      $region47: #{_stem_pool.2} parent=35 // pred_region
        %s1238 = smul.u32 32, %s20
      $region48: #{_stem_pool.2} parent=35 // pred_fallthru
        _
    $region36: #{_stem_pool.2} parent=5 // pred_fallthru
      _
    %p1239 = scmp.le.s32.totalorder 2, %s10
    // Predicated region
    $region49: #{_stem_pool.2} parent=5 // pred_check
      %p1240 = pneg %p1239
    $region50: #{_stem_pool.2} parent=5 // pred_check_branch
      %1242 = sbr.rel (%p1240) target = $region52
    $region51: #{_stem_pool.2} parent=5 // pred_region
      %s1243 = ssub.s32 %s10, 2
      // Predicated region
      $region53: #{_stem_pool.2} parent=51 // pred_check
        %p1244 = pneg %p168
      $region54: #{_stem_pool.2} parent=51 // pred_check_branch
        %1246 = sbr.rel (%p1244) target = $region56
      $region55: #{_stem_pool.2} parent=51 // pred_region
        %s1247 = smul.u32 32, %s23
        %p1248 = scmp.lt.s32.totalorder %s1247, 255
        %s1249 = scalar_select %p1248, %s1247, 255
        %p1250 = scmp.lt.s32.totalorder %s24, 0
        %s1251 = scalar_select %p1250, %s24, 0
        %s1252 = sadd.s32 %s1251, %s1249
        %s1253 = smul.addr %s1252, 4
        %s1254 = scalar_lea.vmem %s4, %s1253
      $region56: #{_stem_pool.2} parent=51 // pred_fallthru
        _
    $region52: #{_stem_pool.2} parent=5 // pred_fallthru
      _
  $region6: #{_stem_pool.2} parent=0 // loop_footer
    %s14 = sadd.s32 1, %s10
  $region7: #{_stem_pool.2} parent=0 // loop_footer_branch
    %9 = sbr.rel target = $region3
  $region8: #{_stem_pool.2} parent=0 // loop_exit
    _

// kernel: _stem_pool.3
$region0: #{_stem_pool.3}
  #allocation0 [shape = 'u32[]', space=smem, size = 0x4, offset = 0x4, fixed_abs, tag = 'smem constant byte address 0x4 - core index']
  #allocation1 [shape = 'u32[144,128]{1,0:T(1,128)}', space=vmem, size = 0x12000, scoped, tag = 'internal scratch']
  %s0 = inlined_call_operand.vmem [shape: bf16[256,128], index: 0, kind: input, shape index: {}]
  %s1 = inlined_call_operand.vmem [shape: bf16[256,128], index: 1, kind: input, shape index: {}]
  %s2 = inlined_call_operand.vmem [shape: bf16[256,128], index: 2, kind: input, shape index: {}]
  %s3 = inlined_call_operand.vmem [shape: bf16[256,128], index: 3, kind: input, shape index: {}]
  %s4 = inlined_call_operand.vmem [shape: bf16[256,128], index: 4, kind: input, shape index: {}]
  %s5 = inlined_call_operand.vmem [shape: bf16[256,128], index: 5, kind: input, shape index: {}]
  %s6 = inlined_call_operand.vmem [shape: bf16[256,128], index: 6, kind: input, shape index: {}]
  %s7 = inlined_call_operand.vmem [shape: bf16[256,128], index: 7, kind: input, shape index: {}]
  %s8 = inlined_call_operand.vmem [shape: bf16[256,128], index: 8, kind: input, shape index: {}]
  %s9 = inlined_call_operand.vmem [shape: bf16[256,128], index: 9, kind: output, shape index: {}]
  %s10 = sld [smem:[#allocation0]]
  $region46: #{_stem_pool.3} parent=0
    _
  %s12 = ssub.s32 1, %s10
  %s13 = scalar_select 0, %s12, %s10
  // Predicated region
  $region2: #{_stem_pool.3} parent=0 // pred_check
    _
  $region3: #{_stem_pool.3} parent=0 // pred_check_branch
    %15 = sbr.rel (0) target = $region5
  $region4: #{_stem_pool.3} parent=0 // pred_region
    _
  $region5: #{_stem_pool.3} parent=0 // pred_fallthru
    _
  // Predicated region
  $region6: #{_stem_pool.3} parent=0 // pred_check
    _
  $region7: #{_stem_pool.3} parent=0 // pred_check_branch
    %17 = sbr.rel (0) target = $region9
  $region8: #{_stem_pool.3} parent=0 // pred_region
    _
  $region9: #{_stem_pool.3} parent=0 // pred_fallthru
    _
  // Predicated region
  $region10: #{_stem_pool.3} parent=0 // pred_check
    _
  $region11: #{_stem_pool.3} parent=0 // pred_check_branch
    %19 = sbr.rel (0) target = $region13
  $region12: #{_stem_pool.3} parent=0 // pred_region
    _
  $region13: #{_stem_pool.3} parent=0 // pred_fallthru
    _
  // Predicated region
  $region14: #{_stem_pool.3} parent=0 // pred_check
    _
  $region15: #{_stem_pool.3} parent=0 // pred_check_branch
    %21 = sbr.rel (0) target = $region17
  $region16: #{_stem_pool.3} parent=0 // pred_region
    _
  $region17: #{_stem_pool.3} parent=0 // pred_fallthru
    _
  // Predicated region
  $region18: #{_stem_pool.3} parent=0 // pred_check
    _
  $region19: #{_stem_pool.3} parent=0 // pred_check_branch
    %23 = sbr.rel (0) target = $region21
  $region20: #{_stem_pool.3} parent=0 // pred_region
    _
  $region21: #{_stem_pool.3} parent=0 // pred_fallthru
    _
  // Predicated region
  $region22: #{_stem_pool.3} parent=0 // pred_check
    _
  $region23: #{_stem_pool.3} parent=0 // pred_check_branch
    %25 = sbr.rel (0) target = $region25
  $region24: #{_stem_pool.3} parent=0 // pred_region
    _
  $region25: #{_stem_pool.3} parent=0 // pred_fallthru
    _
  // Predicated region
  $region26: #{_stem_pool.3} parent=0 // pred_check
    _
  $region27: #{_stem_pool.3} parent=0 // pred_check_branch
    %27 = sbr.rel (0) target = $region29
  $region28: #{_stem_pool.3} parent=0 // pred_region
    _
  $region29: #{_stem_pool.3} parent=0 // pred_fallthru
    _
  // Predicated region
  $region30: #{_stem_pool.3} parent=0 // pred_check
    _
  $region31: #{_stem_pool.3} parent=0 // pred_check_branch
    %29 = sbr.rel (0) target = $region33
  $region32: #{_stem_pool.3} parent=0 // pred_region
    _
  $region33: #{_stem_pool.3} parent=0 // pred_fallthru
    _
  // Predicated region
  $region34: #{_stem_pool.3} parent=0 // pred_check
    _
  $region35: #{_stem_pool.3} parent=0 // pred_check_branch
    %31 = sbr.rel (0) target = $region37
  $region36: #{_stem_pool.3} parent=0 // pred_region
    _
  $region37: #{_stem_pool.3} parent=0 // pred_fallthru
    _
  %v32 = vld [vmem:[%s0] sm:$0xf]
  %v33 = vld [vmem:[%s0 + $0x4] sm:$0xf]
  %v34 = vld [vmem:[%s0 + $0x8] sm:$0xf]
  %v35 = vld [vmem:[%s0 + $0xc] sm:$0xf]
  %v36 = vld [vmem:[%s0 + $0x10] sm:$0xf]
  %v37 = vld [vmem:[%s0 + $0x14] sm:$0xf]
  %v38 = vld [vmem:[%s0 + $0x18] sm:$0xf]
  %v39 = vld [vmem:[%s0 + $0x1c] sm:$0xf]
  %v40 = vld [vmem:[%s0 + $0x20] sm:$0xf]
  %v41 = vld [vmem:[%s0 + $0x24] sm:$0xf]
  %v42 = vld [vmem:[%s0 + $0x28] sm:$0xf]
  %v43 = vld [vmem:[%s0 + $0x2c] sm:$0xf]
  %v44 = vld [vmem:[%s0 + $0x30] sm:$0xf]
  %v45 = vld [vmem:[%s0 + $0x34] sm:$0xf]
  %v46 = vld [vmem:[%s0 + $0x38] sm:$0xf]
  %v47 = vld [vmem:[%s0 + $0x3c] sm:$0xf]
  %v48 = vld [vmem:[%s0 + $0x40] sm:$0xf]
  %v49 = vld [vmem:[%s0 + $0x44] sm:$0xf]
  %v50 = vld [vmem:[%s0 + $0x48] sm:$0xf]
  %v51 = vld [vmem:[%s0 + $0x4c] sm:$0xf]
  %v52 = vld [vmem:[%s0 + $0x50] sm:$0xf]
  %v53 = vld [vmem:[%s0 + $0x54] sm:$0xf]
  %v54 = vld [vmem:[%s0 + $0x58] sm:$0xf]
  %v55 = vld [vmem:[%s0 + $0x5c] sm:$0xf]
  %v56 = vld [vmem:[%s0 + $0x60] sm:$0xf]
  %v57 = vld [vmem:[%s0 + $0x64] sm:$0xf]
  %v58 = vld [vmem:[%s0 + $0x68] sm:$0xf]
  %v59 = vld [vmem:[%s0 + $0x6c] sm:$0xf]
  %v60 = vld [vmem:[%s0 + $0x70] sm:$0xf]
  %v61 = vld [vmem:[%s0 + $0x74] sm:$0xf]
  %v62 = vld [vmem:[%s0 + $0x78] sm:$0xf]
  %v63 = vld [vmem:[%s0 + $0x7c] sm:$0xf]
  %v64 = vld [vmem:[%s1] sm:$0xf]
  %v65 = vld [vmem:[%s1 + $0x4] sm:$0xf]
  %v66 = vld [vmem:[%s1 + $0x8] sm:$0xf]
  %v67 = vld [vmem:[%s1 + $0xc] sm:$0xf]
  %v68 = vld [vmem:[%s1 + $0x10] sm:$0xf]
  %v69 = vld [vmem:[%s1 + $0x14] sm:$0xf]
  %v70 = vld [vmem:[%s1 + $0x18] sm:$0xf]
  %v71 = vld [vmem:[%s1 + $0x1c] sm:$0xf]
  %v72 = vld [vmem:[%s1 + $0x20] sm:$0xf]
  %v73 = vld [vmem:[%s1 + $0x24] sm:$0xf]
  %v74 = vld [vmem:[%s1 + $0x28] sm:$0xf]
  %v75 = vld [vmem:[%s1 + $0x2c] sm:$0xf]
  %v76 = vld [vmem:[%s1 + $0x30] sm:$0xf]
  %v77 = vld [vmem:[%s1 + $0x34] sm:$0xf]
  %v78 = vld [vmem:[%s1 + $0x38] sm:$0xf]
  %v79 = vld [vmem:[%s1 + $0x3c] sm:$0xf]
  %v80 = vld [vmem:[%s1 + $0x40] sm:$0xf]
  %v81 = vld [vmem:[%s1 + $0x44] sm:$0xf]
  %v82 = vld [vmem:[%s1 + $0x48] sm:$0xf]
  %v83 = vld [vmem:[%s1 + $0x4c] sm:$0xf]
  %v84 = vld [vmem:[%s1 + $0x50] sm:$0xf]
  %v85 = vld [vmem:[%s1 + $0x54] sm:$0xf]
  %v86 = vld [vmem:[%s1 + $0x58] sm:$0xf]
  %v87 = vld [vmem:[%s1 + $0x5c] sm:$0xf]
  %v88 = vld [vmem:[%s1 + $0x60] sm:$0xf]
  %v89 = vld [vmem:[%s1 + $0x64] sm:$0xf]
  %v90 = vld [vmem:[%s1 + $0x68] sm:$0xf]
  %v91 = vld [vmem:[%s1 + $0x6c] sm:$0xf]
  %v92 = vld [vmem:[%s1 + $0x70] sm:$0xf]
  %v93 = vld [vmem:[%s1 + $0x74] sm:$0xf]
  %v94 = vld [vmem:[%s1 + $0x78] sm:$0xf]
  %v95 = vld [vmem:[%s1 + $0x7c] sm:$0xf]
  %v96 = vmax.bf16 %v32, %v64
  %v97 = vmax.bf16 %v33, %v65
  %v98 = vmax.bf16 %v34, %v66
  %v99 = vmax.bf16 %v35, %v67
  %v100 = vmax.bf16 %v36, %v68
  %v101 = vmax.bf16 %v37, %v69
  %v102 = vmax.bf16 %v38, %v70
  %v103 = vmax.bf16 %v39, %v71
  %v104 = vmax.bf16 %v40, %v72
  %v105 = vmax.bf16 %v41, %v73
  %v106 = vmax.bf16 %v42, %v74
  %v107 = vmax.bf16 %v43, %v75
  %v108 = vmax.bf16 %v44, %v76
  %v109 = vmax.bf16 %v45, %v77
  %v110 = vmax.bf16 %v46, %v78
  %v111 = vmax.bf16 %v47, %v79
  %v112 = vmax.bf16 %v48, %v80
  %v113 = vmax.bf16 %v49, %v81
  %v114 = vmax.bf16 %v50, %v82
  %v115 = vmax.bf16 %v51, %v83
  %v116 = vmax.bf16 %v52, %v84
  %v117 = vmax.bf16 %v53, %v85
  %v118 = vmax.bf16 %v54, %v86
  %v119 = vmax.bf16 %v55, %v87
  %v120 = vmax.bf16 %v56, %v88
  %v121 = vmax.bf16 %v57, %v89
  %v122 = vmax.bf16 %v58, %v90
  %v123 = vmax.bf16 %v59, %v91
  %v124 = vmax.bf16 %v60, %v92
  %v125 = vmax.bf16 %v61, %v93
  %v126 = vmax.bf16 %v62, %v94
  %v127 = vmax.bf16 %v63, %v95
  %v128 = vld [vmem:[%s2] sm:$0xf]
  %v129 = vld [vmem:[%s2 + $0x4] sm:$0xf]
  %v130 = vld [vmem:[%s2 + $0x8] sm:$0xf]
  %v131 = vld [vmem:[%s2 + $0xc] sm:$0xf]
  %v132 = vld [vmem:[%s2 + $0x10] sm:$0xf]
  %v133 = vld [vmem:[%s2 + $0x14] sm:$0xf]
  %v134 = vld [vmem:[%s2 + $0x18] sm:$0xf]
  %v135 = vld [vmem:[%s2 + $0x1c] sm:$0xf]
  %v136 = vld [vmem:[%s2 + $0x20] sm:$0xf]
  %v137 = vld [vmem:[%s2 + $0x24] sm:$0xf]
  %v138 = vld [vmem:[%s2 + $0x28] sm:$0xf]
  %v139 = vld [vmem:[%s2 + $0x2c] sm:$0xf]
  %v140 = vld [vmem:[%s2 + $0x30] sm:$0xf]
  %v141 = vld [vmem:[%s2 + $0x34] sm:$0xf]
  %v142 = vld [vmem:[%s2 + $0x38] sm:$0xf]
  %v143 = vld [vmem:[%s2 + $0x3c] sm:$0xf]
  %v144 = vld [vmem:[%s2 + $0x40] sm:$0xf]
  %v145 = vld [vmem:[%s2 + $0x44] sm:$0xf]
  %v146 = vld [vmem:[%s2 + $0x48] sm:$0xf]
  %v147 = vld [vmem:[%s2 + $0x4c] sm:$0xf]
  %v148 = vld [vmem:[%s2 + $0x50] sm:$0xf]
  %v149 = vld [vmem:[%s2 + $0x54] sm:$0xf]
  %v150 = vld [vmem:[%s2 + $0x58] sm:$0xf]
  %v151 = vld [vmem:[%s2 + $0x5c] sm:$0xf]
  %v152 = vld [vmem:[%s2 + $0x60] sm:$0xf]
  %v153 = vld [vmem:[%s2 + $0x64] sm:$0xf]
  %v154 = vld [vmem:[%s2 + $0x68] sm:$0xf]
  %v155 = vld [vmem:[%s2 + $0x6c] sm:$0xf]
  %v156 = vld [vmem:[%s2 + $0x70] sm:$0xf]
  %v157 = vld [vmem:[%s2 + $0x74] sm:$0xf]
  %v158 = vld [vmem:[%s2 + $0x78] sm:$0xf]
  %v159 = vld [vmem:[%s2 + $0x7c] sm:$0xf]
  %v160 = vmax.bf16 %v96, %v128
  %v161 = vmax.bf16 %v97, %v129
  %v162 = vmax.bf16 %v98, %v130
  %v163 = vmax.bf16 %v99, %v131
  %v164 = vmax.bf16 %v100, %v132
  %v165 = vmax.bf16 %v101, %v133
  %v166 = vmax.bf16 %v102, %v134
  %v167 = vmax.bf16 %v103, %v135
  %v168 = vmax.bf16 %v104, %v136
  %v169 = vmax.bf16 %v105, %v137
  %v170 = vmax.bf16 %v106, %v138
  %v171 = vmax.bf16 %v107, %v139
  %v172 = vmax.bf16 %v108, %v140
  %v173 = vmax.bf16 %v109, %v141
  %v174 = vmax.bf16 %v110, %v142
  %v175 = vmax.bf16 %v111, %v143
  %v176 = vmax.bf16 %v112, %v144
  %v177 = vmax.bf16 %v113, %v145
  %v178 = vmax.bf16 %v114, %v146
  %v179 = vmax.bf16 %v115, %v147
  %v180 = vmax.bf16 %v116, %v148
  %v181 = vmax.bf16 %v117, %v149
  %v182 = vmax.bf16 %v118, %v150
  %v183 = vmax.bf16 %v119, %v151
  %v184 = vmax.bf16 %v120, %v152
  %v185 = vmax.bf16 %v121, %v153
  %v186 = vmax.bf16 %v122, %v154
  %v187 = vmax.bf16 %v123, %v155
  %v188 = vmax.bf16 %v124, %v156
  %v189 = vmax.bf16 %v125, %v157
  %v190 = vmax.bf16 %v126, %v158
  %v191 = vmax.bf16 %v127, %v159
  %v192 = vld [vmem:[%s3] sm:$0xf]
  %v193 = vld [vmem:[%s3 + $0x4] sm:$0xf]
  %v194 = vld [vmem:[%s3 + $0x8] sm:$0xf]
  %v195 = vld [vmem:[%s3 + $0xc] sm:$0xf]
  %v196 = vld [vmem:[%s3 + $0x10] sm:$0xf]
  %v197 = vld [vmem:[%s3 + $0x14] sm:$0xf]
  %v198 = vld [vmem:[%s3 + $0x18] sm:$0xf]
  %v199 = vld [vmem:[%s3 + $0x1c] sm:$0xf]
  %v200 = vld [vmem:[%s3 + $0x20] sm:$0xf]
  %v201 = vld [vmem:[%s3 + $0x24] sm:$0xf]
  %v202 = vld [vmem:[%s3 + $0x28] sm:$0xf]
  %v203 = vld [vmem:[%s3 + $0x2c] sm:$0xf]
  %v204 = vld [vmem:[%s3 + $0x30] sm:$0xf]
  %v205 = vld [vmem:[%s3 + $0x34] sm:$0xf]
  %v206 = vld [vmem:[%s3 + $0x38] sm:$0xf]
  %v207 = vld [vmem:[%s3 + $0x3c] sm:$0xf]
  %v208 = vld [vmem:[%s3 + $0x40] sm:$0xf]
  %v209 = vld [vmem:[%s3 + $0x44] sm:$0xf]
  %v210 = vld [vmem:[%s3 + $0x48] sm:$0xf]
  %v211 = vld [vmem:[%s3 + $0x4c] sm:$0xf]
  %v212 = vld [vmem:[%s3 + $0x50] sm:$0xf]
  %v213 = vld [vmem:[%s3 + $0x54] sm:$0xf]
  %v214 = vld [vmem:[%s3 + $0x58] sm:$0xf]
  %v215 = vld [vmem:[%s3 + $0x5c] sm:$0xf]
  %v216 = vld [vmem:[%s3 + $0x60] sm:$0xf]
  %v217 = vld [vmem:[%s3 + $0x64] sm:$0xf]
  %v218 = vld [vmem:[%s3 + $0x68] sm:$0xf]
  %v219 = vld [vmem:[%s3 + $0x6c] sm:$0xf]
  %v220 = vld [vmem:[%s3 + $0x70] sm:$0xf]
  %v221 = vld [vmem:[%s3 + $0x74] sm:$0xf]
  %v222 = vld [vmem:[%s3 + $0x78] sm:$0xf]
  %v223 = vld [vmem:[%s3 + $0x7c] sm:$0xf]
  %v224 = vmax.bf16 %v160, %v192
  %v225 = vmax.bf16 %v161, %v193
  %v226 = vmax.bf16 %v162, %v194
  %v227 = vmax.bf16 %v163, %v195
  %v228 = vmax.bf16 %v164, %v196
  %v229 = vmax.bf16 %v165, %v197
  %v230 = vmax.bf16 %v166, %v198
  %v231 = vmax.bf16 %v167, %v199
  %v232 = vmax.bf16 %v168, %v200
  %v233 = vmax.bf16 %v169, %v201
  %v234 = vmax.bf16 %v170, %v202
  %v235 = vmax.bf16 %v171, %v203
  %v236 = vmax.bf16 %v172, %v204
  %v237 = vmax.bf16 %v173, %v205
  %v238 = vmax.bf16 %v174, %v206
  %v239 = vmax.bf16 %v175, %v207
  %v240 = vmax.bf16 %v176, %v208
  %v241 = vmax.bf16 %v177, %v209
  %v242 = vmax.bf16 %v178, %v210
  %v243 = vmax.bf16 %v179, %v211
  %v244 = vmax.bf16 %v180, %v212
  %v245 = vmax.bf16 %v181, %v213
  %v246 = vmax.bf16 %v182, %v214
  %v247 = vmax.bf16 %v183, %v215
  %v248 = vmax.bf16 %v184, %v216
  %v249 = vmax.bf16 %v185, %v217
  %v250 = vmax.bf16 %v186, %v218
  %v251 = vmax.bf16 %v187, %v219
  %v252 = vmax.bf16 %v188, %v220
  %v253 = vmax.bf16 %v189, %v221
  %v254 = vmax.bf16 %v190, %v222
  %v255 = vmax.bf16 %v191, %v223
  %v256 = vld [vmem:[%s4] sm:$0xf]
  %v257 = vld [vmem:[%s4 + $0x4] sm:$0xf]
  %v258 = vld [vmem:[%s4 + $0x8] sm:$0xf]
  %v259 = vld [vmem:[%s4 + $0xc] sm:$0xf]
  %v260 = vld [vmem:[%s4 + $0x10] sm:$0xf]
  %v261 = vld [vmem:[%s4 + $0x14] sm:$0xf]
  %v262 = vld [vmem:[%s4 + $0x18] sm:$0xf]
  %v263 = vld [vmem:[%s4 + $0x1c] sm:$0xf]
  %v264 = vld [vmem:[%s4 + $0x20] sm:$0xf]
  %v265 = vld [vmem:[%s4 + $0x24] sm:$0xf]
  %v266 = vld [vmem:[%s4 + $0x28] sm:$0xf]
  %v267 = vld [vmem:[%s4 + $0x2c] sm:$0xf]
  %v268 = vld [vmem:[%s4 + $0x30] sm:$0xf]
  %v269 = vld [vmem:[%s4 + $0x34] sm:$0xf]
  %v270 = vld [vmem:[%s4 + $0x38] sm:$0xf]
  %v271 = vld [vmem:[%s4 + $0x3c] sm:$0xf]
  %v272 = vld [vmem:[%s4 + $0x40] sm:$0xf]
  %v273 = vld [vmem:[%s4 + $0x44] sm:$0xf]
  %v274 = vld [vmem:[%s4 + $0x48] sm:$0xf]
  %v275 = vld [vmem:[%s4 + $0x4c] sm:$0xf]
  %v276 = vld [vmem:[%s4 + $0x50] sm:$0xf]
  %v277 = vld [vmem:[%s4 + $0x54] sm:$0xf]
  %v278 = vld [vmem:[%s4 + $0x58] sm:$0xf]
  %v279 = vld [vmem:[%s4 + $0x5c] sm:$0xf]
  %v280 = vld [vmem:[%s4 + $0x60] sm:$0xf]
  %v281 = vld [vmem:[%s4 + $0x64] sm:$0xf]
  %v282 = vld [vmem:[%s4 + $0x68] sm:$0xf]
  %v283 = vld [vmem:[%s4 + $0x6c] sm:$0xf]
  %v284 = vld [vmem:[%s4 + $0x70] sm:$0xf]
  %v285 = vld [vmem:[%s4 + $0x74] sm:$0xf]
  %v286 = vld [vmem:[%s4 + $0x78] sm:$0xf]
  %v287 = vld [vmem:[%s4 + $0x7c] sm:$0xf]
  %v288 = vmax.bf16 %v224, %v256
  %v289 = vmax.bf16 %v225, %v257
  %v290 = vmax.bf16 %v226, %v258
  %v291 = vmax.bf16 %v227, %v259
  %v292 = vmax.bf16 %v228, %v260
  %v293 = vmax.bf16 %v229, %v261
  %v294 = vmax.bf16 %v230, %v262
  %v295 = vmax.bf16 %v231, %v263
  %v296 = vmax.bf16 %v232, %v264
  %v297 = vmax.bf16 %v233, %v265
  %v298 = vmax.bf16 %v234, %v266
  %v299 = vmax.bf16 %v235, %v267
  %v300 = vmax.bf16 %v236, %v268
  %v301 = vmax.bf16 %v237, %v269
  %v302 = vmax.bf16 %v238, %v270
  %v303 = vmax.bf16 %v239, %v271
  %v304 = vmax.bf16 %v240, %v272
  %v305 = vmax.bf16 %v241, %v273
  %v306 = vmax.bf16 %v242, %v274
  %v307 = vmax.bf16 %v243, %v275
  %v308 = vmax.bf16 %v244, %v276
  %v309 = vmax.bf16 %v245, %v277
  %v310 = vmax.bf16 %v246, %v278
  %v311 = vmax.bf16 %v247, %v279
  %v312 = vmax.bf16 %v248, %v280
  %v313 = vmax.bf16 %v249, %v281
  %v314 = vmax.bf16 %v250, %v282
  %v315 = vmax.bf16 %v251, %v283
  %v316 = vmax.bf16 %v252, %v284
  %v317 = vmax.bf16 %v253, %v285
  %v318 = vmax.bf16 %v254, %v286
  %v319 = vmax.bf16 %v255, %v287
  %v320 = vld [vmem:[%s5] sm:$0xf]
  %v321 = vld [vmem:[%s5 + $0x4] sm:$0xf]
  %v322 = vld [vmem:[%s5 + $0x8] sm:$0xf]
  %v323 = vld [vmem:[%s5 + $0xc] sm:$0xf]
  %v324 = vld [vmem:[%s5 + $0x10] sm:$0xf]
  %v325 = vld [vmem:[%s5 + $0x14] sm:$0xf]
  %v326 = vld [vmem:[%s5 + $0x18] sm:$0xf]
  %v327 = vld [vmem:[%s5 + $0x1c] sm:$0xf]
  %v328 = vld [vmem:[%s5 + $0x20] sm:$0xf]
  %v329 = vld [vmem:[%s5 + $0x24] sm:$0xf]
  %v330 = vld [vmem:[%s5 + $0x28] sm:$0xf]
  %v331 = vld [vmem:[%s5 + $0x2c] sm:$0xf]
  %v332 = vld [vmem:[%s5 + $0x30] sm:$0xf]
  %v333 = vld [vmem:[%s5 + $0x34] sm:$0xf]
  %v334 = vld [vmem:[%s5 + $0x38] sm:$0xf]
  %v335 = vld [vmem:[%s5 + $0x3c] sm:$0xf]
  %v336 = vld [vmem:[%s5 + $0x40] sm:$0xf]
  %v337 = vld [vmem:[%s5 + $0x44] sm:$0xf]
  %v338 = vld [vmem:[%s5 + $0x48] sm:$0xf]
  %v339 = vld [vmem:[%s5 + $0x4c] sm:$0xf]
  %v340 = vld [vmem:[%s5 + $0x50] sm:$0xf]
  %v341 = vld [vmem:[%s5 + $0x54] sm:$0xf]
  %v342 = vld [vmem:[%s5 + $0x58] sm:$0xf]
  %v343 = vld [vmem:[%s5 + $0x5c] sm:$0xf]
  %v344 = vld [vmem:[%s5 + $0x60] sm:$0xf]
  %v345 = vld [vmem:[%s5 + $0x64] sm:$0xf]
  %v346 = vld [vmem:[%s5 + $0x68] sm:$0xf]
  %v347 = vld [vmem:[%s5 + $0x6c] sm:$0xf]
  %v348 = vld [vmem:[%s5 + $0x70] sm:$0xf]
  %v349 = vld [vmem:[%s5 + $0x74] sm:$0xf]
  %v350 = vld [vmem:[%s5 + $0x78] sm:$0xf]
  %v351 = vld [vmem:[%s5 + $0x7c] sm:$0xf]
  %v352 = vmax.bf16 %v288, %v320
  %v353 = vmax.bf16 %v289, %v321
  %v354 = vmax.bf16 %v290, %v322
  %v355 = vmax.bf16 %v291, %v323
  %v356 = vmax.bf16 %v292, %v324
  %v357 = vmax.bf16 %v293, %v325
  %v358 = vmax.bf16 %v294, %v326
  %v359 = vmax.bf16 %v295, %v327
  %v360 = vmax.bf16 %v296, %v328
  %v361 = vmax.bf16 %v297, %v329
  %v362 = vmax.bf16 %v298, %v330
  %v363 = vmax.bf16 %v299, %v331
  %v364 = vmax.bf16 %v300, %v332
  %v365 = vmax.bf16 %v301, %v333
  %v366 = vmax.bf16 %v302, %v334
  %v367 = vmax.bf16 %v303, %v335
  %v368 = vmax.bf16 %v304, %v336
  %v369 = vmax.bf16 %v305, %v337
  %v370 = vmax.bf16 %v306, %v338
  %v371 = vmax.bf16 %v307, %v339
  %v372 = vmax.bf16 %v308, %v340
  %v373 = vmax.bf16 %v309, %v341
  %v374 = vmax.bf16 %v310, %v342
  %v375 = vmax.bf16 %v311, %v343
  %v376 = vmax.bf16 %v312, %v344
  %v377 = vmax.bf16 %v313, %v345
  %v378 = vmax.bf16 %v314, %v346
  %v379 = vmax.bf16 %v315, %v347
  %v380 = vmax.bf16 %v316, %v348
  %v381 = vmax.bf16 %v317, %v349
  %v382 = vmax.bf16 %v318, %v350
  %v383 = vmax.bf16 %v319, %v351
  %v384 = vld [vmem:[%s6] sm:$0xf]
  %v385 = vld [vmem:[%s6 + $0x4] sm:$0xf]
  %v386 = vld [vmem:[%s6 + $0x8] sm:$0xf]
  %v387 = vld [vmem:[%s6 + $0xc] sm:$0xf]
  %v388 = vld [vmem:[%s6 + $0x10] sm:$0xf]
  %v389 = vld [vmem:[%s6 + $0x14] sm:$0xf]
  %v390 = vld [vmem:[%s6 + $0x18] sm:$0xf]
  %v391 = vld [vmem:[%s6 + $0x1c] sm:$0xf]
  %v392 = vld [vmem:[%s6 + $0x20] sm:$0xf]
  %v393 = vld [vmem:[%s6 + $0x24] sm:$0xf]
  %v394 = vld [vmem:[%s6 + $0x28] sm:$0xf]
  %v395 = vld [vmem:[%s6 + $0x2c] sm:$0xf]
  %v396 = vld [vmem:[%s6 + $0x30] sm:$0xf]
  %v397 = vld [vmem:[%s6 + $0x34] sm:$0xf]
  %v398 = vld [vmem:[%s6 + $0x38] sm:$0xf]
  %v399 = vld [vmem:[%s6 + $0x3c] sm:$0xf]
  %v400 = vld [vmem:[%s6 + $0x40] sm:$0xf]
  %v401 = vld [vmem:[%s6 + $0x44] sm:$0xf]
  %v402 = vld [vmem:[%s6 + $0x48] sm:$0xf]
  %v403 = vld [vmem:[%s6 + $0x4c] sm:$0xf]
  %v404 = vld [vmem:[%s6 + $0x50] sm:$0xf]
  %v405 = vld [vmem:[%s6 + $0x54] sm:$0xf]
  %v406 = vld [vmem:[%s6 + $0x58] sm:$0xf]
  %v407 = vld [vmem:[%s6 + $0x5c] sm:$0xf]
  %v408 = vld [vmem:[%s6 + $0x60] sm:$0xf]
  %v409 = vld [vmem:[%s6 + $0x64] sm:$0xf]
  %v410 = vld [vmem:[%s6 + $0x68] sm:$0xf]
  %v411 = vld [vmem:[%s6 + $0x6c] sm:$0xf]
  %v412 = vld [vmem:[%s6 + $0x70] sm:$0xf]
  %v413 = vld [vmem:[%s6 + $0x74] sm:$0xf]
  %v414 = vld [vmem:[%s6 + $0x78] sm:$0xf]
  %v415 = vld [vmem:[%s6 + $0x7c] sm:$0xf]
  %v416 = vmax.bf16 %v352, %v384
  %v417 = vmax.bf16 %v353, %v385
  %v418 = vmax.bf16 %v354, %v386
  %v419 = vmax.bf16 %v355, %v387
  %v420 = vmax.bf16 %v356, %v388
  %v421 = vmax.bf16 %v357, %v389
  %v422 = vmax.bf16 %v358, %v390
  %v423 = vmax.bf16 %v359, %v391
  %v424 = vmax.bf16 %v360, %v392
  %v425 = vmax.bf16 %v361, %v393
  %v426 = vmax.bf16 %v362, %v394
  %v427 = vmax.bf16 %v363, %v395
  %v428 = vmax.bf16 %v364, %v396
  %v429 = vmax.bf16 %v365, %v397
  %v430 = vmax.bf16 %v366, %v398
  %v431 = vmax.bf16 %v367, %v399
  %v432 = vmax.bf16 %v368, %v400
  %v433 = vmax.bf16 %v369, %v401
  %v434 = vmax.bf16 %v370, %v402
  %v435 = vmax.bf16 %v371, %v403
  %v436 = vmax.bf16 %v372, %v404
  %v437 = vmax.bf16 %v373, %v405
  %v438 = vmax.bf16 %v374, %v406
  %v439 = vmax.bf16 %v375, %v407
  %v440 = vmax.bf16 %v376, %v408
  %v441 = vmax.bf16 %v377, %v409
  %v442 = vmax.bf16 %v378, %v410
  %v443 = vmax.bf16 %v379, %v411
  %v444 = vmax.bf16 %v380, %v412
  %v445 = vmax.bf16 %v381, %v413
  %v446 = vmax.bf16 %v382, %v414
  %v447 = vmax.bf16 %v383, %v415
  %v448 = vld [vmem:[%s7] sm:$0xf]
  %v449 = vld [vmem:[%s7 + $0x4] sm:$0xf]
  %v450 = vld [vmem:[%s7 + $0x8] sm:$0xf]
  %v451 = vld [vmem:[%s7 + $0xc] sm:$0xf]
  %v452 = vld [vmem:[%s7 + $0x10] sm:$0xf]
  %v453 = vld [vmem:[%s7 + $0x14] sm:$0xf]
  %v454 = vld [vmem:[%s7 + $0x18] sm:$0xf]
  %v455 = vld [vmem:[%s7 + $0x1c] sm:$0xf]
  %v456 = vld [vmem:[%s7 + $0x20] sm:$0xf]
  %v457 = vld [vmem:[%s7 + $0x24] sm:$0xf]
  %v458 = vld [vmem:[%s7 + $0x28] sm:$0xf]
  %v459 = vld [vmem:[%s7 + $0x2c] sm:$0xf]
  %v460 = vld [vmem:[%s7 + $0x30] sm:$0xf]
  %v461 = vld [vmem:[%s7 + $0x34] sm:$0xf]
  %v462 = vld [vmem:[%s7 + $0x38] sm:$0xf]
  %v463 = vld [vmem:[%s7 + $0x3c] sm:$0xf]
  %v464 = vld [vmem:[%s7 + $0x40] sm:$0xf]
  %v465 = vld [vmem:[%s7 + $0x44] sm:$0xf]
  %v466 = vld [vmem:[%s7 + $0x48] sm:$0xf]
  %v467 = vld [vmem:[%s7 + $0x4c] sm:$0xf]
  %v468 = vld [vmem:[%s7 + $0x50] sm:$0xf]
  %v469 = vld [vmem:[%s7 + $0x54] sm:$0xf]
  %v470 = vld [vmem:[%s7 + $0x58] sm:$0xf]
  %v471 = vld [vmem:[%s7 + $0x5c] sm:$0xf]
  %v472 = vld [vmem:[%s7 + $0x60] sm:$0xf]
  %v473 = vld [vmem:[%s7 + $0x64] sm:$0xf]
  %v474 = vld [vmem:[%s7 + $0x68] sm:$0xf]
  %v475 = vld [vmem:[%s7 + $0x6c] sm:$0xf]
  %v476 = vld [vmem:[%s7 + $0x70] sm:$0xf]
  %v477 = vld [vmem:[%s7 + $0x74] sm:$0xf]
  %v478 = vld [vmem:[%s7 + $0x78] sm:$0xf]
  %v479 = vld [vmem:[%s7 + $0x7c] sm:$0xf]
  %v480 = vmax.bf16 %v416, %v448
  %v481 = vmax.bf16 %v417, %v449
  %v482 = vmax.bf16 %v418, %v450
  %v483 = vmax.bf16 %v419, %v451
  %v484 = vmax.bf16 %v420, %v452
  %v485 = vmax.bf16 %v421, %v453
  %v486 = vmax.bf16 %v422, %v454
  %v487 = vmax.bf16 %v423, %v455
  %v488 = vmax.bf16 %v424, %v456
  %v489 = vmax.bf16 %v425, %v457
  %v490 = vmax.bf16 %v426, %v458
  %v491 = vmax.bf16 %v427, %v459
  %v492 = vmax.bf16 %v428, %v460
  %v493 = vmax.bf16 %v429, %v461
  %v494 = vmax.bf16 %v430, %v462
  %v495 = vmax.bf16 %v431, %v463
  %v496 = vmax.bf16 %v432, %v464
  %v497 = vmax.bf16 %v433, %v465
  %v498 = vmax.bf16 %v434, %v466
  %v499 = vmax.bf16 %v435, %v467
  %v500 = vmax.bf16 %v436, %v468
  %v501 = vmax.bf16 %v437, %v469
  %v502 = vmax.bf16 %v438, %v470
  %v503 = vmax.bf16 %v439, %v471
  %v504 = vmax.bf16 %v440, %v472
  %v505 = vmax.bf16 %v441, %v473
  %v506 = vmax.bf16 %v442, %v474
  %v507 = vmax.bf16 %v443, %v475
  %v508 = vmax.bf16 %v444, %v476
  %v509 = vmax.bf16 %v445, %v477
  %v510 = vmax.bf16 %v446, %v478
  %v511 = vmax.bf16 %v447, %v479
  %v512 = vld [vmem:[%s8] sm:$0xf]
  %v513 = vld [vmem:[%s8 + $0x4] sm:$0xf]
  %v514 = vld [vmem:[%s8 + $0x8] sm:$0xf]
  %v515 = vld [vmem:[%s8 + $0xc] sm:$0xf]
  %v516 = vld [vmem:[%s8 + $0x10] sm:$0xf]
  %v517 = vld [vmem:[%s8 + $0x14] sm:$0xf]
  %v518 = vld [vmem:[%s8 + $0x18] sm:$0xf]
  %v519 = vld [vmem:[%s8 + $0x1c] sm:$0xf]
  %v520 = vld [vmem:[%s8 + $0x20] sm:$0xf]
  %v521 = vld [vmem:[%s8 + $0x24] sm:$0xf]
  %v522 = vld [vmem:[%s8 + $0x28] sm:$0xf]
  %v523 = vld [vmem:[%s8 + $0x2c] sm:$0xf]
  %v524 = vld [vmem:[%s8 + $0x30] sm:$0xf]
  %v525 = vld [vmem:[%s8 + $0x34] sm:$0xf]
  %v526 = vld [vmem:[%s8 + $0x38] sm:$0xf]
  %v527 = vld [vmem:[%s8 + $0x3c] sm:$0xf]
  %v528 = vld [vmem:[%s8 + $0x40] sm:$0xf]
  %v529 = vld [vmem:[%s8 + $0x44] sm:$0xf]
  %v530 = vld [vmem:[%s8 + $0x48] sm:$0xf]
  %v531 = vld [vmem:[%s8 + $0x4c] sm:$0xf]
  %v532 = vld [vmem:[%s8 + $0x50] sm:$0xf]
  %v533 = vld [vmem:[%s8 + $0x54] sm:$0xf]
  %v534 = vld [vmem:[%s8 + $0x58] sm:$0xf]
  %v535 = vld [vmem:[%s8 + $0x5c] sm:$0xf]
  %v536 = vld [vmem:[%s8 + $0x60] sm:$0xf]
  %v537 = vld [vmem:[%s8 + $0x64] sm:$0xf]
  %v538 = vld [vmem:[%s8 + $0x68] sm:$0xf]
  %v539 = vld [vmem:[%s8 + $0x6c] sm:$0xf]
  %v540 = vld [vmem:[%s8 + $0x70] sm:$0xf]
  %v541 = vld [vmem:[%s8 + $0x74] sm:$0xf]
  %v542 = vld [vmem:[%s8 + $0x78] sm:$0xf]
  %v543 = vld [vmem:[%s8 + $0x7c] sm:$0xf]
  %v544 = vmax.bf16 %v480, %v512
  %v545 = vmax.bf16 %v481, %v513
  %v546 = vmax.bf16 %v482, %v514
  %v547 = vmax.bf16 %v483, %v515
  %v548 = vmax.bf16 %v484, %v516
  %v549 = vmax.bf16 %v485, %v517
  %v550 = vmax.bf16 %v486, %v518
  %v551 = vmax.bf16 %v487, %v519
  %v552 = vmax.bf16 %v488, %v520
  %v553 = vmax.bf16 %v489, %v521
  %v554 = vmax.bf16 %v490, %v522
  %v555 = vmax.bf16 %v491, %v523
  %v556 = vmax.bf16 %v492, %v524
  %v557 = vmax.bf16 %v493, %v525
  %v558 = vmax.bf16 %v494, %v526
  %v559 = vmax.bf16 %v495, %v527
  %v560 = vmax.bf16 %v496, %v528
  %v561 = vmax.bf16 %v497, %v529
  %v562 = vmax.bf16 %v498, %v530
  %v563 = vmax.bf16 %v499, %v531
  %v564 = vmax.bf16 %v500, %v532
  %v565 = vmax.bf16 %v501, %v533
  %v566 = vmax.bf16 %v502, %v534
  %v567 = vmax.bf16 %v503, %v535
  %v568 = vmax.bf16 %v504, %v536
  %v569 = vmax.bf16 %v505, %v537
  %v570 = vmax.bf16 %v506, %v538
  %v571 = vmax.bf16 %v507, %v539
  %v572 = vmax.bf16 %v508, %v540
  %v573 = vmax.bf16 %v509, %v541
  %v574 = vmax.bf16 %v510, %v542
  %v575 = vmax.bf16 %v511, %v543
  %576 = vst [vmem:[%s9] sm:$0xf] %v544
  %577 = vst [vmem:[%s9 + $0x4] sm:$0xf] %v545
  %578 = vst [vmem:[%s9 + $0x8] sm:$0xf] %v546
  %579 = vst [vmem:[%s9 + $0xc] sm:$0xf] %v547
  %580 = vst [vmem:[%s9 + $0x10] sm:$0xf] %v548
  %581 = vst [vmem:[%s9 + $0x14] sm:$0xf] %v549
  %582 = vst [vmem:[%s9 + $0x18] sm:$0xf] %v550
  %583 = vst [vmem:[%s9 + $0x1c] sm:$0xf] %v551
  %584 = vst [vmem:[%s9 + $0x20] sm:$0xf] %v552
  %585 = vst [vmem:[%s9 + $0x24] sm:$0xf] %v553
  %586 = vst [vmem:[%s9 + $0x28] sm:$0xf] %v554
  %587 = vst [vmem:[%s9 + $0x2c] sm:$0xf] %v555
  %588 = vst [vmem:[%s9 + $0x30] sm:$0xf] %v556
  %589 = vst [vmem:[%s9 + $0x34] sm:$0xf] %v557
  %590 = vst [vmem:[%s9 + $0x38] sm:$0xf] %v558
  %591 = vst [vmem:[%s9 + $0x3c] sm:$0xf] %v559
  %592 = vst [vmem:[%s9 + $0x40] sm:$0xf] %v560
  %593 = vst [vmem:[%s9 + $0x44] sm:$0xf] %v561
  %594 = vst [vmem:[%s9 + $0x48] sm:$0xf] %v562
  %595 = vst [vmem:[%s9 + $0x4c] sm:$0xf] %v563
  %596 = vst [vmem:[%s9 + $0x50] sm:$0xf] %v564
  %597 = vst [vmem:[%s9 + $0x54] sm:$0xf] %v565
  %598 = vst [vmem:[%s9 + $0x58] sm:$0xf] %v566
  %599 = vst [vmem:[%s9 + $0x5c] sm:$0xf] %v567
  %600 = vst [vmem:[%s9 + $0x60] sm:$0xf] %v568
  %601 = vst [vmem:[%s9 + $0x64] sm:$0xf] %v569
  %602 = vst [vmem:[%s9 + $0x68] sm:$0xf] %v570
  %603 = vst [vmem:[%s9 + $0x6c] sm:$0xf] %v571
  %604 = vst [vmem:[%s9 + $0x70] sm:$0xf] %v572
  %605 = vst [vmem:[%s9 + $0x74] sm:$0xf] %v573
  %606 = vst [vmem:[%s9 + $0x78] sm:$0xf] %v574
  %607 = vst [vmem:[%s9 + $0x7c] sm:$0xf] %v575
  // Predicated region
  $region38: #{_stem_pool.3} parent=0 // pred_check
    _
  $region39: #{_stem_pool.3} parent=0 // pred_check_branch
    %609 = sbr.rel (0) target = $region41
  $region40: #{_stem_pool.3} parent=0 // pred_region
    _
  $region41: #{_stem_pool.3} parent=0 // pred_fallthru
    _
  // Predicated region
  $region42: #{_stem_pool.3} parent=0 // pred_check
    _
  $region43: #{_stem_pool.3} parent=0 // pred_check_branch
    %611 = sbr.rel (0) target = $region45
  $region44: #{_stem_pool.3} parent=0 // pred_region
    _
  $region45: #{_stem_pool.3} parent=0 // pred_fallthru
    _

</llo_original>
